<compile_context>
chip_gen: v5e
topology: v5e:2x2
jax: 0.10.0
libtpu: 0.0.40
codegen_flags: <defaults>
</compile_context>

<pallas_src>
import functools

import jax
import jax.numpy as jnp
from jax.experimental import pallas as pl
from jax.experimental.pallas import tpu as pltpu


# ------------------------------- small helpers ----------------------------------
def _sigmoid(x):
    # sigmoid(x) = 0.5 * tanh(0.5 * x) + 0.5  -> one EUP push instead of exp + recip.
    return 0.5 * jnp.tanh(0.5 * x) + 0.5


def _resident_spec(shape):
    """Full-array block with a constant index map: DMA'd once, stays VMEM-resident
    across all grid steps (weights, initial/final states)."""
    ndim = len(shape)
    return pl.BlockSpec(tuple(shape), lambda c, _n=ndim: (0,) * _n)


def _pick_unroll(bsz, hidden, chunk_t):
    """Adaptive unroll: keep the live f32 working set of the unrolled window
    ((B,4H) gates + (B,H) states) well inside the 64 x 4 KiB vreg file."""
    live_bytes = bsz * (4 * hidden + 4 * hidden) * 4       # gates + h/c/new, f32
    vreg_budget = (64 * 4 * 1024) // 2                     # use at most half the regfile
    return int(max(1, min(chunk_t, 8, vreg_budget // max(live_bytes, 1))))


def _pick_chunk_t(seq, bsz, hidden, budget_bytes=4 << 20):
    """Largest divisor of seq whose per-chunk footprint (x/out double buffers in
    bf16 + f32 xproj scratch) fits a modest per-chunk budget."""
    best = 1
    for c in range(1, seq + 1):
        if seq % c:
            continue
        rows = c * bsz
        foot = 2 * rows * hidden * 2 * 2 + rows * 4 * hidden * 4
        if foot <= budget_bytes:
            best = c
    return best


def _vmem_budget(rows, din, hidden, bsz):
    """vmem_limit_bytes derived from the resident set instead of a hard-coded 32 MiB.
    Clamped to <= 64 MiB so the limit is also valid on v7x's physical VMEM; on
    v5e/v6e the clamp can be raised (~96-100 MiB) for bigger chunks."""
    need = (
        (din * 4 * hidden + hidden * 4 * hidden) * 2 + 4 * hidden * 4   # bf16 weights + f32 bias
        + 2 * rows * din * 2                                            # x chunk, double-buffered bf16
        + 2 * rows * hidden * 2                                         # out chunk, double-buffered bf16
        + rows * 4 * hidden * 4                                         # xproj scratch f32
        + 6 * bsz * hidden * 4                                          # h0/c0, hn/cn, h/c scratch f32
    )
    return int(min(max(2 * need, 16 * 1024 * 1024), 64 * 1024 * 1024))


# --------------------------- shared recurrence body ----------------------------
def _lstm_recurrence(xproj_ref, w_hh_ref, h0, c0, emit, *, hidden, bsz, steps, unroll):
    """Run `steps` LSTM timesteps.  xproj_ref holds the per-chunk input projection
    (steps*B, 4H) f32; h/c live in the fori_loop carry (vregs)."""
    H, B = hidden, bsz
    wdt = w_hh_ref.dtype

    def step(t, carry):
        h, c = carry
        row = pl.multiple_of(t * B, B)
        gates = (xproj_ref[pl.ds(row, B), :]
                 + jnp.dot(h.astype(wdt), w_hh_ref[...],
                           preferred_element_type=jnp.float32))           # (B, 4H) f32
        i_g = _sigmoid(gates[:, 0 * H:1 * H])
        f_g = _sigmoid(gates[:, 1 * H:2 * H])
        g_g = jnp.tanh(gates[:, 2 * H:3 * H])
        o_g = _sigmoid(gates[:, 3 * H:4 * H])
        c_new = f_g * c + i_g * g_g
        h_new = o_g * jnp.tanh(c_new)
        emit(row, h_new)
        return h_new, c_new

    return jax.lax.fori_loop(0, steps, step, (h0, c0), unroll=unroll)


# ---------------------------- intermediate layer --------------------------------
def lstm_layer_kernel(x_ref, h0_ref, c0_ref, w_ih_ref, w_hh_ref, b_ref,
                      out_ref, hn_ref, cn_ref,
                      xproj_sc, h_sc, c_sc,
                      *, hidden, bsz, chunk_t, unroll):
    c_idx = pl.program_id(0)

    @pl.when(c_idx == 0)
    def _():
        h_sc[...] = h0_ref[...]
        c_sc[...] = c0_ref[...]

    # Per-chunk hoisted input projection: (chunk_t*B, Din) @ (Din, 4H) MXU matmul.
    xproj_sc[...] = (jnp.dot(x_ref[...], w_ih_ref[...],
                             preferred_element_type=jnp.float32)
                     + b_ref[...])

    def emit(row, h_new):
        out_ref[pl.ds(row, bsz), :] = h_new.astype(out_ref.dtype)    # bf16 slab store

    h_fin, c_fin = _lstm_recurrence(xproj_sc, w_hh_ref, h_sc[...], c_sc[...], emit,
                                    hidden=hidden, bsz=bsz, steps=chunk_t, unroll=unroll)
    h_sc[...] = h_fin
    c_sc[...] = c_fin

    @pl.when(c_idx == pl.num_programs(0) - 1)
    def _():
        hn_ref[...] = h_fin
        cn_ref[...] = c_fin


# ------------------------- last layer (fused ReLU + FC) --------------------------
def lstm_last_layer_kernel(x_ref, h0_ref, c0_ref, w_ih_ref, w_hh_ref, b_ref,
                           fcw_ref, fcb_ref,
                           fc_ref, hn_ref, cn_ref,
                           xproj_sc, h_sc, c_sc,
                           *, hidden, bsz, chunk_t, unroll):
    c_idx = pl.program_id(0)

    @pl.when(c_idx == 0)
    def _():
        h_sc[...] = h0_ref[...]
        c_sc[...] = c0_ref[...]

    xproj_sc[...] = (jnp.dot(x_ref[...], w_ih_ref[...],
                             preferred_element_type=jnp.float32)
                     + b_ref[...])

    # Last layer's full output sequence is not needed: only out[:, -1] == h_n.
    h_fin, c_fin = _lstm_recurrence(xproj_sc, w_hh_ref, h_sc[...], c_sc[...],
                                    lambda row, h_new: None,
                                    hidden=hidden, bsz=bsz, steps=chunk_t, unroll=unroll)
    h_sc[...] = h_fin
    c_sc[...] = c_fin

    @pl.when(c_idx == pl.num_programs(0) - 1)
    def _():
        hn_ref[...] = h_fin
        cn_ref[...] = c_fin
        # Fused ReLU + Linear on the final hidden state.
        h_relu = jnp.maximum(h_fin, 0.0)
        fc_ref[...] = (jnp.dot(h_relu.astype(fcw_ref.dtype), fcw_ref[...],
                               preferred_element_type=jnp.float32)
                       + fcb_ref[...])


# ------------------------------ pallas_call wrappers -----------------------------
def lstm_layer(x_flat, h0, c0, w_ih_t, w_hh_t, b, *, bsz, seq, chunk_t):
    """x_flat: (T*B, Din) flat time-major bf16.
    Returns (out_seq (T*B, H) bf16, h_n (B,H) f32, c_n (B,H) f32)."""
    TB, din = x_flat.shape
    H = h0.shape[-1]
    assert seq % chunk_t == 0
    n_chunks = seq // chunk_t
    rows = chunk_t * bsz
    unroll = _pick_unroll(bsz, H, chunk_t)
    kernel = functools.partial(lstm_layer_kernel, hidden=H, bsz=bsz,
                               chunk_t=chunk_t, unroll=unroll)
    return pl.pallas_call(
        kernel,
        grid=(n_chunks,),
        out_shape=(
            jax.ShapeDtypeStruct((TB, H), jnp.bfloat16),   # bf16 inter-layer slab
            jax.ShapeDtypeStruct((bsz, H), jnp.float32),   # h_n
            jax.ShapeDtypeStruct((bsz, H), jnp.float32),   # c_n
        ),
        in_specs=[
            pl.BlockSpec((rows, din), lambda c: (c, 0)),   # x chunk (auto double-buffered)
            _resident_spec((bsz, H)),                      # h0
            _resident_spec((bsz, H)),                      # c0
            _resident_spec(w_ih_t.shape),                  # (Din, 4H) bf16
            _resident_spec(w_hh_t.shape),                  # (H, 4H)  bf16
            _resident_spec(b.shape),                       # (1, 4H)  f32
        ],
        out_specs=(
            pl.BlockSpec((rows, H), lambda c: (c, 0)),     # out slab chunk
            _resident_spec((bsz, H)),
            _resident_spec((bsz, H)),
        ),
        scratch_shapes=[
            pltpu.VMEM((rows, 4 * H), jnp.float32),        # per-chunk xproj
            pltpu.VMEM((bsz, H), jnp.float32),             # h carry across chunks
            pltpu.VMEM((bsz, H), jnp.float32),             # c carry across chunks
        ],
        compiler_params=pltpu.CompilerParams(
            dimension_semantics=("arbitrary",),
            vmem_limit_bytes=_vmem_budget(rows, din, H, bsz)),
    )(x_flat, h0, c0, w_ih_t, w_hh_t, b)


def lstm_last_layer(x_flat, h0, c0, w_ih_t, w_hh_t, b, fc_w_t, fc_b, *, bsz, seq, chunk_t):
    """Last LSTM layer with fused ReLU+FC.  Returns (fc_out (B,O), h_n, c_n)."""
    TB, din = x_flat.shape
    H = h0.shape[-1]
    O = fc_w_t.shape[-1]
    assert seq % chunk_t == 0
    n_chunks = seq // chunk_t
    rows = chunk_t * bsz
    unroll = _pick_unroll(bsz, H, chunk_t)
    kernel = functools.partial(lstm_last_layer_kernel, hidden=H, bsz=bsz,
                               chunk_t=chunk_t, unroll=unroll)
    return pl.pallas_call(
        kernel,
        grid=(n_chunks,),
        out_shape=(
            jax.ShapeDtypeStruct((bsz, O), jnp.float32),   # fc(relu(out[:, -1]))
            jax.ShapeDtypeStruct((bsz, H), jnp.float32),   # h_n
            jax.ShapeDtypeStruct((bsz, H), jnp.float32),   # c_n
        ),
        in_specs=[
            pl.BlockSpec((rows, din), lambda c: (c, 0)),
            _resident_spec((bsz, H)),
            _resident_spec((bsz, H)),
            _resident_spec(w_ih_t.shape),
            _resident_spec(w_hh_t.shape),
            _resident_spec(b.shape),
            _resident_spec(fc_w_t.shape),
            _resident_spec(fc_b.shape),
        ],
        out_specs=(
            _resident_spec((bsz, O)),
            _resident_spec((bsz, H)),
            _resident_spec((bsz, H)),
        ),
        scratch_shapes=[
            pltpu.VMEM((rows, 4 * H), jnp.float32),
            pltpu.VMEM((bsz, H), jnp.float32),
            pltpu.VMEM((bsz, H), jnp.float32),
        ],
        compiler_params=pltpu.CompilerParams(
            dimension_semantics=("arbitrary",),
            vmem_limit_bytes=_vmem_budget(rows, din, H, bsz)),
    )(x_flat, h0, c0, w_ih_t, w_hh_t, b, fc_w_t, fc_b)


# --------------------------------- full forward ----------------------------------
def lstm_net_forward(x, h, params, *, chunk_t=None):
    """x: (B, T, D) batch_first; h = (h0, c0) each (n_layers, B, H).
    Returns (out (B, O), (h_n, c_n)) matching the PyTorch module."""
    h0, c0 = h
    B, T, D = x.shape
    H = h0.shape[-1]
    if chunk_t is None:
        chunk_t = _pick_chunk_t(T, B, H)
    # One tiny, one-time relayout to flat time-major (T*B, D) bf16 (MXU operand);
    # all recurrent work stays inside the Pallas kernels afterwards.
    layer_in = jnp.transpose(x, (1, 0, 2)).reshape(T * B, D).astype(jnp.bfloat16)

    n_layers = len(params["lstm"])
    h_ns, c_ns = [], []
    out = None
    for l, (w_ih_t, w_hh_t, b) in enumerate(params["lstm"]):
        if l < n_layers - 1:
            layer_in, h_n, c_n = lstm_layer(layer_in, h0[l], c0[l], w_ih_t, w_hh_t, b,
                                            bsz=B, seq=T, chunk_t=chunk_t)
        else:
            out, h_n, c_n = lstm_last_layer(layer_in, h0[l], c0[l], w_ih_t, w_hh_t, b,
                                            params["fc_w_t"], params["fc_b"],
                                            bsz=B, seq=T, chunk_t=chunk_t)
        h_ns.append(h_n)
        c_ns.append(c_n)
    return out, (jnp.stack(h_ns, axis=0), jnp.stack(c_ns, axis=0))


# ------------------------------ pure-JAX reference -------------------------------
def lstm_net_reference(x, h, params):
    """Reference mirroring the kernel's numerics (bf16 MXU operands, f32 state)."""
    h0, c0 = h
    B, T, D = x.shape
    layer_in = x.astype(jnp.bfloat16)
    h_ns, c_ns = [], []
    for l, (w_ih_t, w_hh_t, b) in enumerate(params["lstm"]):
        H = h0.shape[-1]
        h_t, c_t = h0[l], c0[l]
        outs = []
        for t in range(T):
            x_t = layer_in[:, t, :]
            gates = (jnp.dot(x_t, w_ih_t, preferred_element_type=jnp.float32) + b
                     + jnp.dot(h_t.astype(jnp.bfloat16), w_hh_t,
                               preferred_element_type=jnp.float32))
            i_g = jax.nn.sigmoid(gates[:, 0 * H:1 * H])
            f_g = jax.nn.sigmoid(gates[:, 1 * H:2 * H])
            g_g = jnp.tanh(gates[:, 2 * H:3 * H])
            o_g = jax.nn.sigmoid(gates[:, 3 * H:4 * H])
            c_t = f_g * c_t + i_g * g_g
            h_t = o_g * jnp.tanh(c_t)
            outs.append(h_t)
        h_ns.append(h_t)
        c_ns.append(c_t)
        layer_in = jnp.stack(outs, axis=1).astype(jnp.bfloat16)
    h_relu = jnp.maximum(h_ns[-1], 0.0)
    out = (jnp.dot(h_relu.astype(jnp.bfloat16), params["fc_w_t"],
                   preferred_element_type=jnp.float32) + params["fc_b"])
    return out, (jnp.stack(h_ns, axis=0), jnp.stack(c_ns, axis=0))


# -------------------------------- parameter setup ---------------------------------
def init_params(key, input_dim, hidden_dim, output_dim, n_layers):
    params = {"lstm": []}
    k = 1.0 / jnp.sqrt(hidden_dim)
    for l in range(n_layers):
        in_d = input_dim if l == 0 else hidden_dim
        key, k1, k2, k3, k4 = jax.random.split(key, 5)
        w_ih = jax.random.uniform(k1, (4 * hidden_dim, in_d), jnp.float32, -k, k)
        w_hh = jax.random.uniform(k2, (4 * hidden_dim, hidden_dim), jnp.float32, -k, k)
        b_ih = jax.random.uniform(k3, (4 * hidden_dim,), jnp.float32, -k, k)
        b_hh = jax.random.uniform(k4, (4 * hidden_dim,), jnp.float32, -k, k)
        params["lstm"].append((
            jnp.asarray(w_ih.T, jnp.bfloat16),           # (Din, 4H) pre-transposed bf16
            jnp.asarray(w_hh.T, jnp.bfloat16),           # (H, 4H)   pre-transposed bf16
            (b_ih + b_hh).reshape(1, 4 * hidden_dim),    # (1, 4H)   combined bias f32
        ))
    key, k1, k2 = jax.random.split(key, 3)
    fc_w = jax.random.uniform(k1, (output_dim, hidden_dim), jnp.float32, -k, k)
    params["fc_w_t"] = jnp.asarray(fc_w.T, jnp.bfloat16)             # (H, O) bf16
    params["fc_b"] = jax.random.uniform(k2, (output_dim,), jnp.float32, -k, k).reshape(1, output_dim)
    return params


if __name__ == "__main__":
    # Small demo shapes consistent with the module: B multiple of 8 (sublanes),
    # H = 128 so gate slices / output stores are lane-aligned.
    B, T, D, H, O, L = 8, 8, 16, 128, 4, 2

    key = jax.random.PRNGKey(0)
    key, kx, kh, kc = jax.random.split(key, 4)
    x = jax.random.normal(kx, (B, T, D), jnp.float32)
    params = init_params(key, D, H, O, L)

    # init_hidden equivalent would be zeros; use small random states to also
    # exercise the h0/c0 carry-initialization path.
    h0 = 0.1 * jax.random.normal(kh, (L, B, H), jnp.float32)
    c0 = 0.1 * jax.random.normal(kc, (L, B, H), jnp.float32)

    fwd = jax.jit(functools.partial(lstm_net_forward, chunk_t=2))  # 4 grid steps over T
    out, (h_n, c_n) = fwd(x, (h0, c0), params)
    jax.block_until_ready((out, h_n, c_n))

    assert out.shape == (B, O)
    assert h_n.shape == (L, B, H) and c_n.shape == (L, B, H)

    # Correctness vs a pure-JAX reference with matching (bf16-operand) numerics.
    ref_out, (ref_h, ref_c) = jax.jit(lstm_net_reference)(x, (h0, c0), params)
    assert jnp.allclose(out, ref_out, atol=1e-2, rtol=1e-2)
    assert jnp.allclose(h_n, ref_h, atol=1e-2, rtol=1e-2)
    assert jnp.allclose(c_n, ref_c, atol=1e-2, rtol=1e-2)

    print("KERNEL_OK")
</pallas_src>

<mosaic_0001>
module attributes {stable_mosaic.version = 11 : i64} {
  func.func @lstm_layer_kernel(%arg0: i32, %arg1: memref<16x16xbf16, #tpu.memory_space<vmem>>, %arg2: memref<8x128xf32, #tpu.memory_space<vmem>>, %arg3: memref<8x128xf32, #tpu.memory_space<vmem>>, %arg4: memref<16x512xbf16, #tpu.memory_space<vmem>>, %arg5: memref<128x512xbf16, #tpu.memory_space<vmem>>, %arg6: memref<1x512xf32, #tpu.memory_space<vmem>>, %arg7: memref<16x128xbf16, #tpu.memory_space<vmem>>, %arg8: memref<8x128xf32, #tpu.memory_space<vmem>>, %arg9: memref<8x128xf32, #tpu.memory_space<vmem>>, %arg10: memref<16x512xf32, #tpu.memory_space<vmem>>, %arg11: memref<8x128xf32, #tpu.memory_space<vmem>>, %arg12: memref<8x128xf32, #tpu.memory_space<vmem>>) attributes {dimension_semantics = [#tpu.dimension_semantics<arbitrary>], iteration_bounds = array<i64: 4>, scalar_prefetch = 0 : i64, scratch_operands = 3 : i64, tpu.core_type = #tpu.core_type<tc>, window_params = [{transform_indices = @transform_0, window_bounds = array<i64: 16, 16>}, {pipeline_mode = #tpu.pipeline_mode<synchronous>, transform_indices = @transform_1, window_bounds = array<i64: 8, 128>}, {pipeline_mode = #tpu.pipeline_mode<synchronous>, transform_indices = @transform_2, window_bounds = array<i64: 8, 128>}, {pipeline_mode = #tpu.pipeline_mode<synchronous>, transform_indices = @transform_3, window_bounds = array<i64: 16, 512>}, {pipeline_mode = #tpu.pipeline_mode<synchronous>, transform_indices = @transform_4, window_bounds = array<i64: 128, 512>}, {pipeline_mode = #tpu.pipeline_mode<synchronous>, transform_indices = @transform_5, window_bounds = array<i64: 1, 512>}, {transform_indices = @transform_6, window_bounds = array<i64: 16, 128>}, {pipeline_mode = #tpu.pipeline_mode<synchronous>, transform_indices = @transform_7, window_bounds = array<i64: 8, 128>}, {pipeline_mode = #tpu.pipeline_mode<synchronous>, transform_indices = @transform_8, window_bounds = array<i64: 8, 128>}]} {
    %c0_i32 = arith.constant 0 : i32
    %0 = arith.cmpi eq, %arg0, %c0_i32 : i32
    %1 = arith.extui %0 : i1 to i32
    %c0_i32_0 = arith.constant 0 : i32
    %2 = arith.cmpi ne, %1, %c0_i32_0 : i32
    scf.if %2 {
      %c0_47 = arith.constant 0 : index
      %c0_48 = arith.constant 0 : index
      %101 = vector.load %arg2[%c0_47, %c0_48] : memref<8x128xf32, #tpu.memory_space<vmem>>, vector<8x128xf32>
      %c0_49 = arith.constant 0 : index
      %c0_50 = arith.constant 0 : index
      %102 = vector.load %arg11[%c0_49, %c0_50] : memref<8x128xf32, #tpu.memory_space<vmem>>, vector<8x128xf32>
      tpu.vector_store %arg11[%c0_49, %c0_50], %101 {strides = array<i32>} : memref<8x128xf32, #tpu.memory_space<vmem>>, vector<8x128xf32>,
      %c0_51 = arith.constant 0 : index
      %c0_52 = arith.constant 0 : index
      %103 = vector.load %arg3[%c0_51, %c0_52] : memref<8x128xf32, #tpu.memory_space<vmem>>, vector<8x128xf32>
      %c0_53 = arith.constant 0 : index
      %c0_54 = arith.constant 0 : index
      %104 = vector.load %arg12[%c0_53, %c0_54] : memref<8x128xf32, #tpu.memory_space<vmem>>, vector<8x128xf32>
      tpu.vector_store %arg12[%c0_53, %c0_54], %103 {strides = array<i32>} : memref<8x128xf32, #tpu.memory_space<vmem>>, vector<8x128xf32>,
    } else {
    }
    %c0 = arith.constant 0 : index
    %c0_1 = arith.constant 0 : index
    %3 = vector.load %arg1[%c0, %c0_1] : memref<16x16xbf16, #tpu.memory_space<vmem>>, vector<16x16xbf16>
    %c0_2 = arith.constant 0 : index
    %c0_3 = arith.constant 0 : index
    %4 = vector.load %arg4[%c0_2, %c0_3] : memref<16x512xbf16, #tpu.memory_space<vmem>>, vector<16x512xbf16>
    %cst = arith.constant dense<0.000000e+00> : vector<16x512xf32>
    %5 = tpu.matmul %3, %4, %cst {dimension_numbers = #tpu.dot_dimension_numbers<[1], [0], [0], [1], [0, 0, 1, 1], [], []>} : vector<16x16xbf16>, vector<16x512xbf16>, vector<16x512xf32> -> vector<16x512xf32>
    %c0_4 = arith.constant 0 : index
    %c0_5 = arith.constant 0 : index
    %6 = vector.load %arg6[%c0_4, %c0_5] : memref<1x512xf32, #tpu.memory_space<vmem>>, vector<1x512xf32>
    %7 = vector.broadcast %6 : vector<1x512xf32> to vector<16x512xf32>
    %8 = arith.addf %5, %7 : vector<16x512xf32>
    %c0_6 = arith.constant 0 : index
    %c0_7 = arith.constant 0 : index
    %9 = vector.load %arg10[%c0_6, %c0_7] : memref<16x512xf32, #tpu.memory_space<vmem>>, vector<16x512xf32>
    tpu.vector_store %arg10[%c0_6, %c0_7], %8 {strides = array<i32>} : memref<16x512xf32, #tpu.memory_space<vmem>>, vector<16x512xf32>,
    %c0_8 = arith.constant 0 : index
    %c0_9 = arith.constant 0 : index
    %10 = vector.load %arg11[%c0_8, %c0_9] : memref<8x128xf32, #tpu.memory_space<vmem>>, vector<8x128xf32>
    %c0_10 = arith.constant 0 : index
    %c0_11 = arith.constant 0 : index
    %11 = vector.load %arg12[%c0_10, %c0_11] : memref<8x128xf32, #tpu.memory_space<vmem>>, vector<8x128xf32>
    %c0_i32_12 = arith.constant 0 : i32
    %c8_i32 = arith.constant 8 : i32
    %12 = arith.muli %c0_i32_12, %c8_i32 : i32
    %13 = tpu.assume_multiple %12, 8 : i32
    %14 = arith.index_cast %13 : i32 to index
    %c0_13 = arith.constant 0 : index
    %15 = vector.load %arg10[%14, %c0_13] : memref<16x512xf32, #tpu.memory_space<vmem>>, vector<8x512xf32>
    %16 = arith.truncf %10 : vector<8x128xf32> to vector<8x128xbf16>
    %c0_14 = arith.constant 0 : index
    %c0_15 = arith.constant 0 : index
    %17 = vector.load %arg5[%c0_14, %c0_15] : memref<128x512xbf16, #tpu.memory_space<vmem>>, vector<128x512xbf16>
    %cst_16 = arith.constant dense<0.000000e+00> : vector<8x512xf32>
    %18 = tpu.matmul %16, %17, %cst_16 {dimension_numbers = #tpu.dot_dimension_numbers<[1], [0], [0], [1], [0, 0, 1, 1], [], []>} : vector<8x128xbf16>, vector<128x512xbf16>, vector<8x512xf32> -> vector<8x512xf32>
    %19 = arith.addf %15, %18 : vector<8x512xf32>
    %20 = vector.extract_strided_slice %19 {offsets = [0, 0], sizes = [8, 128], strides = [1, 1]} : vector<8x512xf32> to vector<8x128xf32>
    %cst_17 = arith.constant 5.000000e-01 : f32
    %21 = vector.broadcast %cst_17 : f32 to vector<8x128xf32>
    %22 = arith.mulf %21, %20 : vector<8x128xf32>
    %23 = math.tanh %22 : vector<8x128xf32>
    %cst_18 = arith.constant 5.000000e-01 : f32
    %24 = vector.broadcast %cst_18 : f32 to vector<8x128xf32>
    %25 = arith.mulf %24, %23 : vector<8x128xf32>
    %cst_19 = arith.constant 5.000000e-01 : f32
    %26 = vector.broadcast %cst_19 : f32 to vector<8x128xf32>
    %27 = arith.addf %25, %26 : vector<8x128xf32>
    %28 = vector.extract_strided_slice %19 {offsets = [0, 128], sizes = [8, 128], strides = [1, 1]} : vector<8x512xf32> to vector<8x128xf32>
    %cst_20 = arith.constant 5.000000e-01 : f32
    %29 = vector.broadcast %cst_20 : f32 to vector<8x128xf32>
    %30 = arith.mulf %29, %28 : vector<8x128xf32>
    %31 = math.tanh %30 : vector<8x128xf32>
    %cst_21 = arith.constant 5.000000e-01 : f32
    %32 = vector.broadcast %cst_21 : f32 to vector<8x128xf32>
    %33 = arith.mulf %32, %31 : vector<8x128xf32>
    %cst_22 = arith.constant 5.000000e-01 : f32
    %34 = vector.broadcast %cst_22 : f32 to vector<8x128xf32>
    %35 = arith.addf %33, %34 : vector<8x128xf32>
    %36 = vector.extract_strided_slice %19 {offsets = [0, 256], sizes = [8, 128], strides = [1, 1]} : vector<8x512xf32> to vector<8x128xf32>
    %37 = math.tanh %36 : vector<8x128xf32>
    %38 = vector.extract_strided_slice %19 {offsets = [0, 384], sizes = [8, 128], strides = [1, 1]} : vector<8x512xf32> to vector<8x128xf32>
    %cst_23 = arith.constant 5.000000e-01 : f32
    %39 = vector.broadcast %cst_23 : f32 to vector<8x128xf32>
    %40 = arith.mulf %39, %38 : vector<8x128xf32>
    %41 = math.tanh %40 : vector<8x128xf32>
    %cst_24 = arith.constant 5.000000e-01 : f32
    %42 = vector.broadcast %cst_24 : f32 to vector<8x128xf32>
    %43 = arith.mulf %42, %41 : vector<8x128xf32>
    %cst_25 = arith.constant 5.000000e-01 : f32
    %44 = vector.broadcast %cst_25 : f32 to vector<8x128xf32>
    %45 = arith.addf %43, %44 : vector<8x128xf32>
    %46 = arith.mulf %35, %11 : vector<8x128xf32>
    %47 = arith.mulf %27, %37 : vector<8x128xf32>
    %48 = arith.addf %46, %47 : vector<8x128xf32>
    %49 = math.tanh %48 : vector<8x128xf32>
    %50 = arith.mulf %45, %49 : vector<8x128xf32>
    %51 = arith.truncf %50 : vector<8x128xf32> to vector<8x128xbf16>
    %52 = arith.index_cast %13 : i32 to index
    %c0_26 = arith.constant 0 : index
    %53 = vector.load %arg7[%52, %c0_26] : memref<16x128xbf16, #tpu.memory_space<vmem>>, vector<8x128xbf16>
    tpu.vector_store %arg7[%52, %c0_26], %51 {strides = array<i32>} : memref<16x128xbf16, #tpu.memory_space<vmem>>, vector<8x128xbf16>,
    %c1_i32 = arith.constant 1 : i32
    %c8_i32_27 = arith.constant 8 : i32
    %54 = arith.muli %c1_i32, %c8_i32_27 : i32
    %55 = tpu.assume_multiple %54, 8 : i32
    %56 = arith.index_cast %55 : i32 to index
    %c0_28 = arith.constant 0 : index
    %57 = vector.load %arg10[%56, %c0_28] : memref<16x512xf32, #tpu.memory_space<vmem>>, vector<8x512xf32>
    %58 = arith.truncf %50 : vector<8x128xf32> to vector<8x128xbf16>
    %c0_29 = arith.constant 0 : index
    %c0_30 = arith.constant 0 : index
    %59 = vector.load %arg5[%c0_29, %c0_30] : memref<128x512xbf16, #tpu.memory_space<vmem>>, vector<128x512xbf16>
    %cst_31 = arith.constant dense<0.000000e+00> : vector<8x512xf32>
    %60 = tpu.matmul %58, %59, %cst_31 {dimension_numbers = #tpu.dot_dimension_numbers<[1], [0], [0], [1], [0, 0, 1, 1], [], []>} : vector<8x128xbf16>, vector<128x512xbf16>, vector<8x512xf32> -> vector<8x512xf32>
    %61 = arith.addf %57, %60 : vector<8x512xf32>
    %62 = vector.extract_strided_slice %61 {offsets = [0, 0], sizes = [8, 128], strides = [1, 1]} : vector<8x512xf32> to vector<8x128xf32>
    %cst_32 = arith.constant 5.000000e-01 : f32
    %63 = vector.broadcast %cst_32 : f32 to vector<8x128xf32>
    %64 = arith.mulf %63, %62 : vector<8x128xf32>
    %65 = math.tanh %64 : vector<8x128xf32>
    %cst_33 = arith.constant 5.000000e-01 : f32
    %66 = vector.broadcast %cst_33 : f32 to vector<8x128xf32>
    %67 = arith.mulf %66, %65 : vector<8x128xf32>
    %cst_34 = arith.constant 5.000000e-01 : f32
    %68 = vector.broadcast %cst_34 : f32 to vector<8x128xf32>
    %69 = arith.addf %67, %68 : vector<8x128xf32>
    %70 = vector.extract_strided_slice %61 {offsets = [0, 128], sizes = [8, 128], strides = [1, 1]} : vector<8x512xf32> to vector<8x128xf32>
    %cst_35 = arith.constant 5.000000e-01 : f32
    %71 = vector.broadcast %cst_35 : f32 to vector<8x128xf32>
    %72 = arith.mulf %71, %70 : vector<8x128xf32>
    %73 = math.tanh %72 : vector<8x128xf32>
    %cst_36 = arith.constant 5.000000e-01 : f32
    %74 = vector.broadcast %cst_36 : f32 to vector<8x128xf32>
    %75 = arith.mulf %74, %73 : vector<8x128xf32>
    %cst_37 = arith.constant 5.000000e-01 : f32
    %76 = vector.broadcast %cst_37 : f32 to vector<8x128xf32>
    %77 = arith.addf %75, %76 : vector<8x128xf32>
    %78 = vector.extract_strided_slice %61 {offsets = [0, 256], sizes = [8, 128], strides = [1, 1]} : vector<8x512xf32> to vector<8x128xf32>
    %79 = math.tanh %78 : vector<8x128xf32>
    %80 = vector.extract_strided_slice %61 {offsets = [0, 384], sizes = [8, 128], strides = [1, 1]} : vector<8x512xf32> to vector<8x128xf32>
    %cst_38 = arith.constant 5.000000e-01 : f32
    %81 = vector.broadcast %cst_38 : f32 to vector<8x128xf32>
    %82 = arith.mulf %81, %80 : vector<8x128xf32>
    %83 = math.tanh %82 : vector<8x128xf32>
    %cst_39 = arith.constant 5.000000e-01 : f32
    %84 = vector.broadcast %cst_39 : f32 to vector<8x128xf32>
    %85 = arith.mulf %84, %83 : vector<8x128xf32>
    %cst_40 = arith.constant 5.000000e-01 : f32
    %86 = vector.broadcast %cst_40 : f32 to vector<8x128xf32>
    %87 = arith.addf %85, %86 : vector<8x128xf32>
    %88 = arith.mulf %77, %48 : vector<8x128xf32>
    %89 = arith.mulf %69, %79 : vector<8x128xf32>
    %90 = arith.addf %88, %89 : vector<8x128xf32>
    %91 = math.tanh %90 : vector<8x128xf32>
    %92 = arith.mulf %87, %91 : vector<8x128xf32>
    %93 = arith.truncf %92 : vector<8x128xf32> to vector<8x128xbf16>
    %94 = arith.index_cast %55 : i32 to index
    %c0_41 = arith.constant 0 : index
    %95 = vector.load %arg7[%94, %c0_41] : memref<16x128xbf16, #tpu.memory_space<vmem>>, vector<8x128xbf16>
    tpu.vector_store %arg7[%94, %c0_41], %93 {strides = array<i32>} : memref<16x128xbf16, #tpu.memory_space<vmem>>, vector<8x128xbf16>,
    %c2_i32 = arith.constant 2 : i32
    %c0_42 = arith.constant 0 : index
    %c0_43 = arith.constant 0 : index
    %96 = vector.load %arg11[%c0_42, %c0_43] : memref<8x128xf32, #tpu.memory_space<vmem>>, vector<8x128xf32>
    tpu.vector_store %arg11[%c0_42, %c0_43], %92 {strides = array<i32>} : memref<8x128xf32, #tpu.memory_space<vmem>>, vector<8x128xf32>,
    %c0_44 = arith.constant 0 : index
    %c0_45 = arith.constant 0 : index
    %97 = vector.load %arg12[%c0_44, %c0_45] : memref<8x128xf32, #tpu.memory_space<vmem>>, vector<8x128xf32>
    tpu.vector_store %arg12[%c0_44, %c0_45], %90 {strides = array<i32>} : memref<8x128xf32, #tpu.memory_space<vmem>>, vector<8x128xf32>,
    %c3_i32 = arith.constant 3 : i32
    %98 = arith.cmpi eq, %arg0, %c3_i32 : i32
    %99 = arith.extui %98 : i1 to i32
    %c0_i32_46 = arith.constant 0 : i32
    %100 = arith.cmpi ne, %99, %c0_i32_46 : i32
    scf.if %100 {
      %c0_47 = arith.constant 0 : index
      %c0_48 = arith.constant 0 : index
      %101 = vector.load %arg8[%c0_47, %c0_48] : memref<8x128xf32, #tpu.memory_space<vmem>>, vector<8x128xf32>
      tpu.vector_store %arg8[%c0_47, %c0_48], %92 {strides = array<i32>} : memref<8x128xf32, #tpu.memory_space<vmem>>, vector<8x128xf32>,
      %c0_49 = arith.constant 0 : index
      %c0_50 = arith.constant 0 : index
      %102 = vector.load %arg9[%c0_49, %c0_50] : memref<8x128xf32, #tpu.memory_space<vmem>>, vector<8x128xf32>
      tpu.vector_store %arg9[%c0_49, %c0_50], %90 {strides = array<i32>} : memref<8x128xf32, #tpu.memory_space<vmem>>, vector<8x128xf32>,
    } else {
    }
    return
  }
  func.func @transform_0(%arg0: i32) -> (i32, i32) {
    %c0_i32 = arith.constant 0 : i32
    %c0_i32_0 = arith.constant 0 : i32
    return %arg0, %c0_i32 : i32, i32
  }
  func.func @transform_1(%arg0: i32) -> (i32, i32) {
    %c0_i32 = arith.constant 0 : i32
    %c0_i32_0 = arith.constant 0 : i32
    %c0_i32_1 = arith.constant 0 : i32
    return %c0_i32, %c0_i32_0 : i32, i32
  }
  func.func @transform_2(%arg0: i32) -> (i32, i32) {
    %c0_i32 = arith.constant 0 : i32
    %c0_i32_0 = arith.constant 0 : i32
    %c0_i32_1 = arith.constant 0 : i32
    return %c0_i32, %c0_i32_0 : i32, i32
  }
  func.func @transform_3(%arg0: i32) -> (i32, i32) {
    %c0_i32 = arith.constant 0 : i32
    %c0_i32_0 = arith.constant 0 : i32
    %c0_i32_1 = arith.constant 0 : i32
    return %c0_i32, %c0_i32_0 : i32, i32
  }
  func.func @transform_4(%arg0: i32) -> (i32, i32) {
    %c0_i32 = arith.constant 0 : i32
    %c0_i32_0 = arith.constant 0 : i32
    %c0_i32_1 = arith.constant 0 : i32
    return %c0_i32, %c0_i32_0 : i32, i32
  }
  func.func @transform_5(%arg0: i32) -> (i32, i32) {
    %c0_i32 = arith.constant 0 : i32
    %c0_i32_0 = arith.constant 0 : i32
    %c0_i32_1 = arith.constant 0 : i32
    return %c0_i32, %c0_i32_0 : i32, i32
  }
  func.func @transform_6(%arg0: i32) -> (i32, i32) {
    %c0_i32 = arith.constant 0 : i32
    %c0_i32_0 = arith.constant 0 : i32
    return %arg0, %c0_i32 : i32, i32
  }
  func.func @transform_7(%arg0: i32) -> (i32, i32) {
    %c0_i32 = arith.constant 0 : i32
    %c0_i32_0 = arith.constant 0 : i32
    %c0_i32_1 = arith.constant 0 : i32
    return %c0_i32, %c0_i32_0 : i32, i32
  }
  func.func @transform_8(%arg0: i32) -> (i32, i32) {
    %c0_i32 = arith.constant 0 : i32
    %c0_i32_0 = arith.constant 0 : i32
    %c0_i32_1 = arith.constant 0 : i32
    return %c0_i32, %c0_i32_0 : i32, i32
  }
}

module attributes {stable_mosaic.version = 11 : i64} {
  func.func @lstm_last_layer_kernel(%arg0: i32, %arg1: memref<16x128xbf16, #tpu.memory_space<vmem>>, %arg2: memref<8x128xf32, #tpu.memory_space<vmem>>, %arg3: memref<8x128xf32, #tpu.memory_space<vmem>>, %arg4: memref<128x512xbf16, #tpu.memory_space<vmem>>, %arg5: memref<128x512xbf16, #tpu.memory_space<vmem>>, %arg6: memref<1x512xf32, #tpu.memory_space<vmem>>, %arg7: memref<128x4xbf16, #tpu.memory_space<vmem>>, %arg8: memref<1x4xf32, #tpu.memory_space<vmem>>, %arg9: memref<8x4xf32, #tpu.memory_space<vmem>>, %arg10: memref<8x128xf32, #tpu.memory_space<vmem>>, %arg11: memref<8x128xf32, #tpu.memory_space<vmem>>, %arg12: memref<16x512xf32, #tpu.memory_space<vmem>>, %arg13: memref<8x128xf32, #tpu.memory_space<vmem>>, %arg14: memref<8x128xf32, #tpu.memory_space<vmem>>) attributes {dimension_semantics = [#tpu.dimension_semantics<arbitrary>], iteration_bounds = array<i64: 4>, scalar_prefetch = 0 : i64, scratch_operands = 3 : i64, tpu.core_type = #tpu.core_type<tc>, window_params = [{transform_indices = @transform_0, window_bounds = array<i64: 16, 128>}, {pipeline_mode = #tpu.pipeline_mode<synchronous>, transform_indices = @transform_1, window_bounds = array<i64: 8, 128>}, {pipeline_mode = #tpu.pipeline_mode<synchronous>, transform_indices = @transform_2, window_bounds = array<i64: 8, 128>}, {pipeline_mode = #tpu.pipeline_mode<synchronous>, transform_indices = @transform_3, window_bounds = array<i64: 128, 512>}, {pipeline_mode = #tpu.pipeline_mode<synchronous>, transform_indices = @transform_4, window_bounds = array<i64: 128, 512>}, {pipeline_mode = #tpu.pipeline_mode<synchronous>, transform_indices = @transform_5, window_bounds = array<i64: 1, 512>}, {pipeline_mode = #tpu.pipeline_mode<synchronous>, transform_indices = @transform_6, window_bounds = array<i64: 128, 4>}, {pipeline_mode = #tpu.pipeline_mode<synchronous>, transform_indices = @transform_7, window_bounds = array<i64: 1, 4>}, {pipeline_mode = #tpu.pipeline_mode<synchronous>, transform_indices = @transform_8, window_bounds = array<i64: 8, 4>}, {pipeline_mode = #tpu.pipeline_mode<synchronous>, transform_indices = @transform_9, window_bounds = array<i64: 8, 128>}, {pipeline_mode = #tpu.pipeline_mode<synchronous>, transform_indices = @transform_10, window_bounds = array<i64: 8, 128>}]} {
    %c0_i32 = arith.constant 0 : i32
    %0 = arith.cmpi eq, %arg0, %c0_i32 : i32
    %1 = arith.extui %0 : i1 to i32
    %c0_i32_0 = arith.constant 0 : i32
    %2 = arith.cmpi ne, %1, %c0_i32_0 : i32
    scf.if %2 {
      %c0_45 = arith.constant 0 : index
      %c0_46 = arith.constant 0 : index
      %95 = vector.load %arg2[%c0_45, %c0_46] : memref<8x128xf32, #tpu.memory_space<vmem>>, vector<8x128xf32>
      %c0_47 = arith.constant 0 : index
      %c0_48 = arith.constant 0 : index
      %96 = vector.load %arg13[%c0_47, %c0_48] : memref<8x128xf32, #tpu.memory_space<vmem>>, vector<8x128xf32>
      tpu.vector_store %arg13[%c0_47, %c0_48], %95 {strides = array<i32>} : memref<8x128xf32, #tpu.memory_space<vmem>>, vector<8x128xf32>,
      %c0_49 = arith.constant 0 : index
      %c0_50 = arith.constant 0 : index
      %97 = vector.load %arg3[%c0_49, %c0_50] : memref<8x128xf32, #tpu.memory_space<vmem>>, vector<8x128xf32>
      %c0_51 = arith.constant 0 : index
      %c0_52 = arith.constant 0 : index
      %98 = vector.load %arg14[%c0_51, %c0_52] : memref<8x128xf32, #tpu.memory_space<vmem>>, vector<8x128xf32>
      tpu.vector_store %arg14[%c0_51, %c0_52], %97 {strides = array<i32>} : memref<8x128xf32, #tpu.memory_space<vmem>>, vector<8x128xf32>,
    } else {
    }
    %c0 = arith.constant 0 : index
    %c0_1 = arith.constant 0 : index
    %3 = vector.load %arg1[%c0, %c0_1] : memref<16x128xbf16, #tpu.memory_space<vmem>>, vector<16x128xbf16>
    %c0_2 = arith.constant 0 : index
    %c0_3 = arith.constant 0 : index
    %4 = vector.load %arg4[%c0_2, %c0_3] : memref<128x512xbf16, #tpu.memory_space<vmem>>, vector<128x512xbf16>
    %cst = arith.constant dense<0.000000e+00> : vector<16x512xf32>
    %5 = tpu.matmul %3, %4, %cst {dimension_numbers = #tpu.dot_dimension_numbers<[1], [0], [0], [1], [0, 0, 1, 1], [], []>} : vector<16x128xbf16>, vector<128x512xbf16>, vector<16x512xf32> -> vector<16x512xf32>
    %c0_4 = arith.constant 0 : index
    %c0_5 = arith.constant 0 : index
    %6 = vector.load %arg6[%c0_4, %c0_5] : memref<1x512xf32, #tpu.memory_space<vmem>>, vector<1x512xf32>
    %7 = vector.broadcast %6 : vector<1x512xf32> to vector<16x512xf32>
    %8 = arith.addf %5, %7 : vector<16x512xf32>
    %c0_6 = arith.constant 0 : index
    %c0_7 = arith.constant 0 : index
    %9 = vector.load %arg12[%c0_6, %c0_7] : memref<16x512xf32, #tpu.memory_space<vmem>>, vector<16x512xf32>
    tpu.vector_store %arg12[%c0_6, %c0_7], %8 {strides = array<i32>} : memref<16x512xf32, #tpu.memory_space<vmem>>, vector<16x512xf32>,
    %c0_8 = arith.constant 0 : index
    %c0_9 = arith.constant 0 : index
    %10 = vector.load %arg13[%c0_8, %c0_9] : memref<8x128xf32, #tpu.memory_space<vmem>>, vector<8x128xf32>
    %c0_10 = arith.constant 0 : index
    %c0_11 = arith.constant 0 : index
    %11 = vector.load %arg14[%c0_10, %c0_11] : memref<8x128xf32, #tpu.memory_space<vmem>>, vector<8x128xf32>
    %c0_i32_12 = arith.constant 0 : i32
    %c8_i32 = arith.constant 8 : i32
    %12 = arith.muli %c0_i32_12, %c8_i32 : i32
    %13 = tpu.assume_multiple %12, 8 : i32
    %14 = arith.index_cast %13 : i32 to index
    %c0_13 = arith.constant 0 : index
    %15 = vector.load %arg12[%14, %c0_13] : memref<16x512xf32, #tpu.memory_space<vmem>>, vector<8x512xf32>
    %16 = arith.truncf %10 : vector<8x128xf32> to vector<8x128xbf16>
    %c0_14 = arith.constant 0 : index
    %c0_15 = arith.constant 0 : index
    %17 = vector.load %arg5[%c0_14, %c0_15] : memref<128x512xbf16, #tpu.memory_space<vmem>>, vector<128x512xbf16>
    %cst_16 = arith.constant dense<0.000000e+00> : vector<8x512xf32>
    %18 = tpu.matmul %16, %17, %cst_16 {dimension_numbers = #tpu.dot_dimension_numbers<[1], [0], [0], [1], [0, 0, 1, 1], [], []>} : vector<8x128xbf16>, vector<128x512xbf16>, vector<8x512xf32> -> vector<8x512xf32>
    %19 = arith.addf %15, %18 : vector<8x512xf32>
    %20 = vector.extract_strided_slice %19 {offsets = [0, 0], sizes = [8, 128], strides = [1, 1]} : vector<8x512xf32> to vector<8x128xf32>
    %cst_17 = arith.constant 5.000000e-01 : f32
    %21 = vector.broadcast %cst_17 : f32 to vector<8x128xf32>
    %22 = arith.mulf %21, %20 : vector<8x128xf32>
    %23 = math.tanh %22 : vector<8x128xf32>
    %cst_18 = arith.constant 5.000000e-01 : f32
    %24 = vector.broadcast %cst_18 : f32 to vector<8x128xf32>
    %25 = arith.mulf %24, %23 : vector<8x128xf32>
    %cst_19 = arith.constant 5.000000e-01 : f32
    %26 = vector.broadcast %cst_19 : f32 to vector<8x128xf32>
    %27 = arith.addf %25, %26 : vector<8x128xf32>
    %28 = vector.extract_strided_slice %19 {offsets = [0, 128], sizes = [8, 128], strides = [1, 1]} : vector<8x512xf32> to vector<8x128xf32>
    %cst_20 = arith.constant 5.000000e-01 : f32
    %29 = vector.broadcast %cst_20 : f32 to vector<8x128xf32>
    %30 = arith.mulf %29, %28 : vector<8x128xf32>
    %31 = math.tanh %30 : vector<8x128xf32>
    %cst_21 = arith.constant 5.000000e-01 : f32
    %32 = vector.broadcast %cst_21 : f32 to vector<8x128xf32>
    %33 = arith.mulf %32, %31 : vector<8x128xf32>
    %cst_22 = arith.constant 5.000000e-01 : f32
    %34 = vector.broadcast %cst_22 : f32 to vector<8x128xf32>
    %35 = arith.addf %33, %34 : vector<8x128xf32>
    %36 = vector.extract_strided_slice %19 {offsets = [0, 256], sizes = [8, 128], strides = [1, 1]} : vector<8x512xf32> to vector<8x128xf32>
    %37 = math.tanh %36 : vector<8x128xf32>
    %38 = vector.extract_strided_slice %19 {offsets = [0, 384], sizes = [8, 128], strides = [1, 1]} : vector<8x512xf32> to vector<8x128xf32>
    %cst_23 = arith.constant 5.000000e-01 : f32
    %39 = vector.broadcast %cst_23 : f32 to vector<8x128xf32>
    %40 = arith.mulf %39, %38 : vector<8x128xf32>
    %41 = math.tanh %40 : vector<8x128xf32>
    %cst_24 = arith.constant 5.000000e-01 : f32
    %42 = vector.broadcast %cst_24 : f32 to vector<8x128xf32>
    %43 = arith.mulf %42, %41 : vector<8x128xf32>
    %cst_25 = arith.constant 5.000000e-01 : f32
    %44 = vector.broadcast %cst_25 : f32 to vector<8x128xf32>
    %45 = arith.addf %43, %44 : vector<8x128xf32>
    %46 = arith.mulf %35, %11 : vector<8x128xf32>
    %47 = arith.mulf %27, %37 : vector<8x128xf32>
    %48 = arith.addf %46, %47 : vector<8x128xf32>
    %49 = math.tanh %48 : vector<8x128xf32>
    %50 = arith.mulf %45, %49 : vector<8x128xf32>
    %c1_i32 = arith.constant 1 : i32
    %c8_i32_26 = arith.constant 8 : i32
    %51 = arith.muli %c1_i32, %c8_i32_26 : i32
    %52 = tpu.assume_multiple %51, 8 : i32
    %53 = arith.index_cast %52 : i32 to index
    %c0_27 = arith.constant 0 : index
    %54 = vector.load %arg12[%53, %c0_27] : memref<16x512xf32, #tpu.memory_space<vmem>>, vector<8x512xf32>
    %55 = arith.truncf %50 : vector<8x128xf32> to vector<8x128xbf16>
    %c0_28 = arith.constant 0 : index
    %c0_29 = arith.constant 0 : index
    %56 = vector.load %arg5[%c0_28, %c0_29] : memref<128x512xbf16, #tpu.memory_space<vmem>>, vector<128x512xbf16>
    %cst_30 = arith.constant dense<0.000000e+00> : vector<8x512xf32>
    %57 = tpu.matmul %55, %56, %cst_30 {dimension_numbers = #tpu.dot_dimension_numbers<[1], [0], [0], [1], [0, 0, 1, 1], [], []>} : vector<8x128xbf16>, vector<128x512xbf16>, vector<8x512xf32> -> vector<8x512xf32>
    %58 = arith.addf %54, %57 : vector<8x512xf32>
    %59 = vector.extract_strided_slice %58 {offsets = [0, 0], sizes = [8, 128], strides = [1, 1]} : vector<8x512xf32> to vector<8x128xf32>
    %cst_31 = arith.constant 5.000000e-01 : f32
    %60 = vector.broadcast %cst_31 : f32 to vector<8x128xf32>
    %61 = arith.mulf %60, %59 : vector<8x128xf32>
    %62 = math.tanh %61 : vector<8x128xf32>
    %cst_32 = arith.constant 5.000000e-01 : f32
    %63 = vector.broadcast %cst_32 : f32 to vector<8x128xf32>
    %64 = arith.mulf %63, %62 : vector<8x128xf32>
    %cst_33 = arith.constant 5.000000e-01 : f32
    %65 = vector.broadcast %cst_33 : f32 to vector<8x128xf32>
    %66 = arith.addf %64, %65 : vector<8x128xf32>
    %67 = vector.extract_strided_slice %58 {offsets = [0, 128], sizes = [8, 128], strides = [1, 1]} : vector<8x512xf32> to vector<8x128xf32>
    %cst_34 = arith.constant 5.000000e-01 : f32
    %68 = vector.broadcast %cst_34 : f32 to vector<8x128xf32>
    %69 = arith.mulf %68, %67 : vector<8x128xf32>
    %70 = math.tanh %69 : vector<8x128xf32>
    %cst_35 = arith.constant 5.000000e-01 : f32
    %71 = vector.broadcast %cst_35 : f32 to vector<8x128xf32>
    %72 = arith.mulf %71, %70 : vector<8x128xf32>
    %cst_36 = arith.constant 5.000000e-01 : f32
    %73 = vector.broadcast %cst_36 : f32 to vector<8x128xf32>
    %74 = arith.addf %72, %73 : vector<8x128xf32>
    %75 = vector.extract_strided_slice %58 {offsets = [0, 256], sizes = [8, 128], strides = [1, 1]} : vector<8x512xf32> to vector<8x128xf32>
    %76 = math.tanh %75 : vector<8x128xf32>
    %77 = vector.extract_strided_slice %58 {offsets = [0, 384], sizes = [8, 128], strides = [1, 1]} : vector<8x512xf32> to vector<8x128xf32>
    %cst_37 = arith.constant 5.000000e-01 : f32
    %78 = vector.broadcast %cst_37 : f32 to vector<8x128xf32>
    %79 = arith.mulf %78, %77 : vector<8x128xf32>
    %80 = math.tanh %79 : vector<8x128xf32>
    %cst_38 = arith.constant 5.000000e-01 : f32
    %81 = vector.broadcast %cst_38 : f32 to vector<8x128xf32>
    %82 = arith.mulf %81, %80 : vector<8x128xf32>
    %cst_39 = arith.constant 5.000000e-01 : f32
    %83 = vector.broadcast %cst_39 : f32 to vector<8x128xf32>
    %84 = arith.addf %82, %83 : vector<8x128xf32>
    %85 = arith.mulf %74, %48 : vector<8x128xf32>
    %86 = arith.mulf %66, %76 : vector<8x128xf32>
    %87 = arith.addf %85, %86 : vector<8x128xf32>
    %88 = math.tanh %87 : vector<8x128xf32>
    %89 = arith.mulf %84, %88 : vector<8x128xf32>
    %c2_i32 = arith.constant 2 : i32
    %c0_40 = arith.constant 0 : index
    %c0_41 = arith.constant 0 : index
    %90 = vector.load %arg13[%c0_40, %c0_41] : memref<8x128xf32, #tpu.memory_space<vmem>>, vector<8x128xf32>
    tpu.vector_store %arg13[%c0_40, %c0_41], %89 {strides = array<i32>} : memref<8x128xf32, #tpu.memory_space<vmem>>, vector<8x128xf32>,
    %c0_42 = arith.constant 0 : index
    %c0_43 = arith.constant 0 : index
    %91 = vector.load %arg14[%c0_42, %c0_43] : memref<8x128xf32, #tpu.memory_space<vmem>>, vector<8x128xf32>
    tpu.vector_store %arg14[%c0_42, %c0_43], %87 {strides = array<i32>} : memref<8x128xf32, #tpu.memory_space<vmem>>, vector<8x128xf32>,
    %c3_i32 = arith.constant 3 : i32
    %92 = arith.cmpi eq, %arg0, %c3_i32 : i32
    %93 = arith.extui %92 : i1 to i32
    %c0_i32_44 = arith.constant 0 : i32
    %94 = arith.cmpi ne, %93, %c0_i32_44 : i32
    scf.if %94 {
      %c0_45 = arith.constant 0 : index
      %c0_46 = arith.constant 0 : index
      %95 = vector.load %arg10[%c0_45, %c0_46] : memref<8x128xf32, #tpu.memory_space<vmem>>, vector<8x128xf32>
      tpu.vector_store %arg10[%c0_45, %c0_46], %89 {strides = array<i32>} : memref<8x128xf32, #tpu.memory_space<vmem>>, vector<8x128xf32>,
      %c0_47 = arith.constant 0 : index
      %c0_48 = arith.constant 0 : index
      %96 = vector.load %arg11[%c0_47, %c0_48] : memref<8x128xf32, #tpu.memory_space<vmem>>, vector<8x128xf32>
      tpu.vector_store %arg11[%c0_47, %c0_48], %87 {strides = array<i32>} : memref<8x128xf32, #tpu.memory_space<vmem>>, vector<8x128xf32>,
      %cst_49 = arith.constant 0.000000e+00 : f32
      %97 = vector.broadcast %cst_49 : f32 to vector<8x128xf32>
      %98 = arith.maximumf %89, %97 : vector<8x128xf32>
      %99 = arith.truncf %98 : vector<8x128xf32> to vector<8x128xbf16>
      %c0_50 = arith.constant 0 : index
      %c0_51 = arith.constant 0 : index
      %100 = vector.load %arg7[%c0_50, %c0_51] : memref<128x4xbf16, #tpu.memory_space<vmem>>, vector<128x4xbf16>
      %cst_52 = arith.constant dense<0.000000e+00> : vector<8x4xf32>
      %101 = tpu.matmul %99, %100, %cst_52 {dimension_numbers = #tpu.dot_dimension_numbers<[1], [0], [0], [1], [0, 0, 1, 1], [], []>} : vector<8x128xbf16>, vector<128x4xbf16>, vector<8x4xf32> -> vector<8x4xf32>
      %c0_53 = arith.constant 0 : index
      %c0_54 = arith.constant 0 : index
      %102 = vector.load %arg8[%c0_53, %c0_54] : memref<1x4xf32, #tpu.memory_space<vmem>>, vector<1x4xf32>
      %103 = vector.broadcast %102 : vector<1x4xf32> to vector<8x4xf32>
      %104 = arith.addf %101, %103 : vector<8x4xf32>
      %c0_55 = arith.constant 0 : index
      %c0_56 = arith.constant 0 : index
      %105 = vector.load %arg9[%c0_55, %c0_56] : memref<8x4xf32, #tpu.memory_space<vmem>>, vector<8x4xf32>
      tpu.vector_store %arg9[%c0_55, %c0_56], %104 {strides = array<i32>} : memref<8x4xf32, #tpu.memory_space<vmem>>, vector<8x4xf32>,
    } else {
    }
    return
  }
  func.func @transform_0(%arg0: i32) -> (i32, i32) {
    %c0_i32 = arith.constant 0 : i32
    %c0_i32_0 = arith.constant 0 : i32
    return %arg0, %c0_i32 : i32, i32
  }
  func.func @transform_1(%arg0: i32) -> (i32, i32) {
    %c0_i32 = arith.constant 0 : i32
    %c0_i32_0 = arith.constant 0 : i32
    %c0_i32_1 = arith.constant 0 : i32
    return %c0_i32, %c0_i32_0 : i32, i32
  }
  func.func @transform_2(%arg0: i32) -> (i32, i32) {
    %c0_i32 = arith.constant 0 : i32
    %c0_i32_0 = arith.constant 0 : i32
    %c0_i32_1 = arith.constant 0 : i32
    return %c0_i32, %c0_i32_0 : i32, i32
  }
  func.func @transform_3(%arg0: i32) -> (i32, i32) {
    %c0_i32 = arith.constant 0 : i32
    %c0_i32_0 = arith.constant 0 : i32
    %c0_i32_1 = arith.constant 0 : i32
    return %c0_i32, %c0_i32_0 : i32, i32
  }
  func.func @transform_4(%arg0: i32) -> (i32, i32) {
    %c0_i32 = arith.constant 0 : i32
    %c0_i32_0 = arith.constant 0 : i32
    %c0_i32_1 = arith.constant 0 : i32
    return %c0_i32, %c0_i32_0 : i32, i32
  }
  func.func @transform_5(%arg0: i32) -> (i32, i32) {
    %c0_i32 = arith.constant 0 : i32
    %c0_i32_0 = arith.constant 0 : i32
    %c0_i32_1 = arith.constant 0 : i32
    return %c0_i32, %c0_i32_0 : i32, i32
  }
  func.func @transform_6(%arg0: i32) -> (i32, i32) {
    %c0_i32 = arith.constant 0 : i32
    %c0_i32_0 = arith.constant 0 : i32
    %c0_i32_1 = arith.constant 0 : i32
    return %c0_i32, %c0_i32_0 : i32, i32
  }
  func.func @transform_7(%arg0: i32) -> (i32, i32) {
    %c0_i32 = arith.constant 0 : i32
    %c0_i32_0 = arith.constant 0 : i32
    %c0_i32_1 = arith.constant 0 : i32
    return %c0_i32, %c0_i32_0 : i32, i32
  }
  func.func @transform_8(%arg0: i32) -> (i32, i32) {
    %c0_i32 = arith.constant 0 : i32
    %c0_i32_0 = arith.constant 0 : i32
    %c0_i32_1 = arith.constant 0 : i32
    return %c0_i32, %c0_i32_0 : i32, i32
  }
  func.func @transform_9(%arg0: i32) -> (i32, i32) {
    %c0_i32 = arith.constant 0 : i32
    %c0_i32_0 = arith.constant 0 : i32
    %c0_i32_1 = arith.constant 0 : i32
    return %c0_i32, %c0_i32_0 : i32, i32
  }
  func.func @transform_10(%arg0: i32) -> (i32, i32) {
    %c0_i32 = arith.constant 0 : i32
    %c0_i32_0 = arith.constant 0 : i32
    %c0_i32_1 = arith.constant 0 : i32
    return %c0_i32, %c0_i32_0 : i32, i32
  }
}

</mosaic_0001>

<llo_original>
// kernel: lstm_net_forward.2
$region0: #{lstm_net_forward.2}
  #allocation0 [shape = 'u32[]', space=smem, size = 0x4, offset = 0x4, fixed_abs, tag = 'smem constant byte address 0x4 - core index']
  #allocation1 [shape = 'u32[72,128]{1,0:T(1,128)}', space=vmem, size = 0x9000, scoped, tag = 'internal scratch']
  #allocation2 [shape = 'f32[16,512]{1,0:T(8,128)}', space=vmem, size = 0x8000, scoped, tag = 'scratch operand']
  #allocation3 [shape = 'f32[8,128]{1,0:T(8,128)}', space=vmem, size = 0x1000, scoped, tag = 'scratch operand']
  #allocation4 [shape = 'f32[8,128]{1,0:T(8,128)}', space=vmem, size = 0x1000, scoped, tag = 'scratch operand']
  %s0 = inlined_call_operand.vmem [shape: bf16[64,16], index: 0, kind: input, shape index: {}]
  %s1 = inlined_call_operand.vmem [shape: f32[8,128], index: 1, kind: input, shape index: {}]
  %s2 = inlined_call_operand.vmem [shape: f32[8,128], index: 2, kind: input, shape index: {}]
  %s3 = inlined_call_operand.vmem [shape: bf16[16,512], index: 3, kind: input, shape index: {}]
  %s4 = inlined_call_operand.hbm [shape: bf16[128,512], index: 4, kind: input, shape index: {}]
  %s5 = inlined_call_operand.vmem [shape: f32[1,512], index: 5, kind: input, shape index: {}]
  %s6 = inlined_call_operand.vmem [shape: bf16[64,128], index: 6, kind: output, shape index: {0}]
  %s7 = inlined_call_operand.vmem [shape: f32[8,128], index: 7, kind: output, shape index: {1}]
  %s8 = inlined_call_operand.vmem [shape: f32[8,128], index: 8, kind: output, shape index: {2}]
  %9 = xla_tuple %s6, %s7, %s8
  %s10 = sld [smem:[#allocation0]]
  $region85: #{lstm_net_forward.2} parent=0
    _
  %s12 = ssub.s32 1, %s10
  %s13 = scalar_select 0, %s12, %s10
  $region1: #{lstm_net_forward.2} parent=0
    #allocation5 [shape = 'u8[131072]{0}', space=vmem, size = 0x20000, scoped, tag = 'input window, operand 4, single buffered']
    #allocation6 [shape = 's32[2]{0}', space=sflag, size = 0x8, scoped, tag = 'scoped memory for lstm_net_forward.2']
    %14 = vsyncpa [#allocation6], 0
    loop: start=0, step=1, limit=6
    $region2: #{lstm_net_forward.2} parent=1 // loop_pre_header
      _
    $region3: #{lstm_net_forward.2} parent=1 // loop_header
      %s16 = sphi 0, %s20
      %p17 = scmp.ge.s32.totalorder %s16, 6
      %s26 = sphi 0, %s28
      %s29 = sphi 0, %s26
      %s30 = sphi 0, %s29
      %s46 = sphi 0, %s30
      %s50 = sphi 0, %s50
      %s52 = sphi 0, %s50
      %s53 = sphi 0, %s52
      %s67 = sphi 0, %s53
      %s71 = sphi 0, %s71
      %s73 = sphi 0, %s71
      %s74 = sphi 0, %s73
      %s88 = sphi 0, %s74
      %s92 = sphi 0, %s92
      %s94 = sphi 0, %s92
      %s95 = sphi 0, %s94
      %s109 = sphi 0, %s95
      %s113 = sphi 0, %s113
      %s115 = sphi 0, %s113
      %s116 = sphi 0, %s115
      %s130 = sphi 0, %s116
      %s134 = sphi 0, %s134
      %s136 = sphi 0, %s134
      %s137 = sphi 0, %s136
      %s151 = sphi 0, %s137
      %s157 = sphi 0, %s159
      %s160 = sphi 0, %s157
      %s161 = sphi 0, %s160
      %s177 = sphi 0, %s161
      %s181 = sphi 0, %s181
      %s183 = sphi 0, %s181
      %s184 = sphi 0, %s183
      %s198 = sphi 0, %s184
      %s202 = sphi 0, %s202
      %s204 = sphi 0, %s202
      %s205 = sphi 0, %s204
      %s219 = sphi 0, %s205
    $region4: #{lstm_net_forward.2} parent=1 // loop_header_branch
      %19 = sbr.rel (%p17) target = $region8
    $region5: #{lstm_net_forward.2} parent=1 // loop_body
      %s21 = ssub.s32 %s16, 1
      %s22 = ssub.s32 %s16, 2
      %s23 = sadd.s32 %s16, 1
      %s24 = ssub.s32 %s16, %s23
      %p25 = scmp.eq.s32.totalorder %s24, 0
      %s27 = sadd.s32 %s26, 1
      %s28 = scalar_select %p25, %s26, %s27
      %p31 = pneg %p25
      %p32 = scmp.eq.s32.totalorder %s16, 3
      %p33 = por %p31, %p32
      %p34 = scmp.ne.s32.totalorder %s26, %s29
      %p35 = scmp.eq.s32.totalorder %s16, 0
      %p36 = por %p34, %p35
      %p37 = scmp.ne.s32.totalorder %s26, %s29
      %p38 = scmp.eq.s32.totalorder %s21, 3
      %p39 = por %p37, %p38
      %p40 = scmp.ne.s32.totalorder %s29, %s30
      %p41 = scmp.eq.s32.totalorder %s21, 0
      %p42 = por %p40, %p41
      %p43 = scmp.ne.s32.totalorder %s29, %s30
      %p44 = scmp.eq.s32.totalorder %s22, 3
      %p45 = por %p43, %p44
      %p47 = scmp.ne.s32.totalorder %s30, %s46
      %p48 = scmp.eq.s32.totalorder %s22, 0
      %p49 = por %p47, %p48
      %s51 = sadd.s32 %s50, 1
      %p54 = scmp.eq.s32.totalorder %s16, 3
      %p55 = scmp.ne.s32.totalorder %s50, %s52
      %p56 = scmp.eq.s32.totalorder %s16, 0
      %p57 = por %p55, %p56
      %p58 = scmp.ne.s32.totalorder %s50, %s52
      %p59 = scmp.eq.s32.totalorder %s21, 3
      %p60 = por %p58, %p59
      %p61 = scmp.ne.s32.totalorder %s52, %s53
      %p62 = scmp.eq.s32.totalorder %s21, 0
      %p63 = por %p61, %p62
      %p64 = scmp.ne.s32.totalorder %s52, %s53
      %p65 = scmp.eq.s32.totalorder %s22, 3
      %p66 = por %p64, %p65
      %p68 = scmp.ne.s32.totalorder %s53, %s67
      %p69 = scmp.eq.s32.totalorder %s22, 0
      %p70 = por %p68, %p69
      %s72 = sadd.s32 %s71, 1
      %p75 = scmp.eq.s32.totalorder %s16, 3
      %p76 = scmp.ne.s32.totalorder %s71, %s73
      %p77 = scmp.eq.s32.totalorder %s16, 0
      %p78 = por %p76, %p77
      %p79 = scmp.ne.s32.totalorder %s71, %s73
      %p80 = scmp.eq.s32.totalorder %s21, 3
      %p81 = por %p79, %p80
      %p82 = scmp.ne.s32.totalorder %s73, %s74
      %p83 = scmp.eq.s32.totalorder %s21, 0
      %p84 = por %p82, %p83
      %p85 = scmp.ne.s32.totalorder %s73, %s74
      %p86 = scmp.eq.s32.totalorder %s22, 3
      %p87 = por %p85, %p86
      %p89 = scmp.ne.s32.totalorder %s74, %s88
      %p90 = scmp.eq.s32.totalorder %s22, 0
      %p91 = por %p89, %p90
      %s93 = sadd.s32 %s92, 1
      %p96 = scmp.eq.s32.totalorder %s16, 3
      %p97 = scmp.ne.s32.totalorder %s92, %s94
      %p98 = scmp.eq.s32.totalorder %s16, 0
      %p99 = por %p97, %p98
      %p100 = scmp.ne.s32.totalorder %s92, %s94
      %p101 = scmp.eq.s32.totalorder %s21, 3
      %p102 = por %p100, %p101
      %p103 = scmp.ne.s32.totalorder %s94, %s95
      %p104 = scmp.eq.s32.totalorder %s21, 0
      %p105 = por %p103, %p104
      %p106 = scmp.ne.s32.totalorder %s94, %s95
      %p107 = scmp.eq.s32.totalorder %s22, 3
      %p108 = por %p106, %p107
      %p110 = scmp.ne.s32.totalorder %s95, %s109
      %p111 = scmp.eq.s32.totalorder %s22, 0
      %p112 = por %p110, %p111
      %s114 = sadd.s32 %s113, 1
      %p117 = scmp.eq.s32.totalorder %s16, 3
      %p118 = scmp.ne.s32.totalorder %s113, %s115
      %p119 = scmp.eq.s32.totalorder %s16, 0
      %p120 = por %p118, %p119
      %p121 = scmp.ne.s32.totalorder %s113, %s115
      %p122 = scmp.eq.s32.totalorder %s21, 3
      %p123 = por %p121, %p122
      %p124 = scmp.ne.s32.totalorder %s115, %s116
      %p125 = scmp.eq.s32.totalorder %s21, 0
      %p126 = por %p124, %p125
      %p127 = scmp.ne.s32.totalorder %s115, %s116
      %p128 = scmp.eq.s32.totalorder %s22, 3
      %p129 = por %p127, %p128
      %p131 = scmp.ne.s32.totalorder %s116, %s130
      %p132 = scmp.eq.s32.totalorder %s22, 0
      %p133 = por %p131, %p132
      %s135 = sadd.s32 %s134, 1
      %p138 = scmp.eq.s32.totalorder %s16, 3
      %p139 = scmp.ne.s32.totalorder %s134, %s136
      %p140 = scmp.eq.s32.totalorder %s16, 0
      %p141 = por %p139, %p140
      %p142 = scmp.ne.s32.totalorder %s134, %s136
      %p143 = scmp.eq.s32.totalorder %s21, 3
      %p144 = por %p142, %p143
      %p145 = scmp.ne.s32.totalorder %s136, %s137
      %p146 = scmp.eq.s32.totalorder %s21, 0
      %p147 = por %p145, %p146
      %p148 = scmp.ne.s32.totalorder %s136, %s137
      %p149 = scmp.eq.s32.totalorder %s22, 3
      %p150 = por %p148, %p149
      %p152 = scmp.ne.s32.totalorder %s137, %s151
      %p153 = scmp.eq.s32.totalorder %s22, 0
      %p154 = por %p152, %p153
      %s155 = ssub.s32 %s16, %s23
      %p156 = scmp.eq.s32.totalorder %s155, 0
      %s158 = sadd.s32 %s157, 1
      %s159 = scalar_select %p156, %s157, %s158
      %p162 = pneg %p156
      %p163 = scmp.eq.s32.totalorder %s16, 3
      %p164 = por %p162, %p163
      %p165 = scmp.ne.s32.totalorder %s157, %s160
      %p166 = scmp.eq.s32.totalorder %s16, 0
      %p167 = por %p165, %p166
      %p168 = scmp.ne.s32.totalorder %s157, %s160
      %p169 = scmp.eq.s32.totalorder %s21, 3
      %p170 = por %p168, %p169
      %p171 = scmp.ne.s32.totalorder %s160, %s161
      %p172 = scmp.eq.s32.totalorder %s21, 0
      %p173 = por %p171, %p172
      %p174 = scmp.ne.s32.totalorder %s160, %s161
      %p175 = scmp.eq.s32.totalorder %s22, 3
      %p176 = por %p174, %p175
      %p178 = scmp.ne.s32.totalorder %s161, %s177
      %p179 = scmp.eq.s32.totalorder %s22, 0
      %p180 = por %p178, %p179
      %s182 = sadd.s32 %s181, 1
      %p185 = scmp.eq.s32.totalorder %s16, 3
      %p186 = scmp.ne.s32.totalorder %s181, %s183
      %p187 = scmp.eq.s32.totalorder %s16, 0
      %p188 = por %p186, %p187
      %p189 = scmp.ne.s32.totalorder %s181, %s183
      %p190 = scmp.eq.s32.totalorder %s21, 3
      %p191 = por %p189, %p190
      %p192 = scmp.ne.s32.totalorder %s183, %s184
      %p193 = scmp.eq.s32.totalorder %s21, 0
      %p194 = por %p192, %p193
      %p195 = scmp.ne.s32.totalorder %s183, %s184
      %p196 = scmp.eq.s32.totalorder %s22, 3
      %p197 = por %p195, %p196
      %p199 = scmp.ne.s32.totalorder %s184, %s198
      %p200 = scmp.eq.s32.totalorder %s22, 0
      %p201 = por %p199, %p200
      %s203 = sadd.s32 %s202, 1
      %p206 = scmp.eq.s32.totalorder %s16, 3
      %p207 = scmp.ne.s32.totalorder %s202, %s204
      %p208 = scmp.eq.s32.totalorder %s16, 0
      %p209 = por %p207, %p208
      %p210 = scmp.ne.s32.totalorder %s202, %s204
      %p211 = scmp.eq.s32.totalorder %s21, 3
      %p212 = por %p210, %p211
      %p213 = scmp.ne.s32.totalorder %s204, %s205
      %p214 = scmp.eq.s32.totalorder %s21, 0
      %p215 = por %p213, %p214
      %p216 = scmp.ne.s32.totalorder %s204, %s205
      %p217 = scmp.eq.s32.totalorder %s22, 3
      %p218 = por %p216, %p217
      %p220 = scmp.ne.s32.totalorder %s205, %s219
      %p221 = scmp.eq.s32.totalorder %s22, 0
      %p222 = por %p220, %p221
      %p223 = scmp.le.s32.totalorder 1, %s16
      %p224 = scmp.lt.s32.totalorder %s16, 5
      %p225 = pnand %p223, %p224
      %p226 = pneg %p225
      // Predicated region
      $region9: #{lstm_net_forward.2} parent=5 // pred_check
        _
      $region10: #{lstm_net_forward.2} parent=5 // pred_check_branch
        %228 = sbr.rel (%p225) target = $region12
      $region11: #{lstm_net_forward.2} parent=5 // pred_region
        %s229 = ssub.s32 %s16, 1
        // Predicated region
        $region13: #{lstm_net_forward.2} parent=11 // pred_check
          %p230 = pneg %p63
        $region14: #{lstm_net_forward.2} parent=11 // pred_check_branch
          %232 = sbr.rel (%p230) target = $region16
        $region15: #{lstm_net_forward.2} parent=11 // pred_region
          _
        $region16: #{lstm_net_forward.2} parent=11 // pred_fallthru
          _
        // Predicated region
        $region17: #{lstm_net_forward.2} parent=11 // pred_check
          %p233 = pneg %p84
        $region18: #{lstm_net_forward.2} parent=11 // pred_check_branch
          %235 = sbr.rel (%p233) target = $region20
        $region19: #{lstm_net_forward.2} parent=11 // pred_region
          _
        $region20: #{lstm_net_forward.2} parent=11 // pred_fallthru
          _
        // Predicated region
        $region21: #{lstm_net_forward.2} parent=11 // pred_check
          %p236 = pneg %p105
        $region22: #{lstm_net_forward.2} parent=11 // pred_check_branch
          %238 = sbr.rel (%p236) target = $region24
        $region23: #{lstm_net_forward.2} parent=11 // pred_region
          _
        $region24: #{lstm_net_forward.2} parent=11 // pred_fallthru
          _
        // Predicated region
        $region25: #{lstm_net_forward.2} parent=11 // pred_check
          %p239 = pneg %p126
        $region26: #{lstm_net_forward.2} parent=11 // pred_check_branch
          %241 = sbr.rel (%p239) target = $region28
        $region27: #{lstm_net_forward.2} parent=11 // pred_region
          %243 = vsyncadd [#allocation6], 0
          %s244 = sshll.u32 %s4, 4
          %s245 = int_to_ptr.hbm [resolvable:$true] %s244
          %s246 = sshll.u32 [#allocation5], 4
          %s247 = int_to_ptr.vmem [resolvable:$true] %s246
          %252 = dma.hbm_to_vmem [thread:$0]  %s245, 4096, %s247, [#allocation6], 256, 256, 16
        $region28: #{lstm_net_forward.2} parent=11 // pred_fallthru
          _
        // Predicated region
        $region29: #{lstm_net_forward.2} parent=11 // pred_check
          %p253 = pneg %p147
        $region30: #{lstm_net_forward.2} parent=11 // pred_check_branch
          %255 = sbr.rel (%p253) target = $region32
        $region31: #{lstm_net_forward.2} parent=11 // pred_region
          _
        $region32: #{lstm_net_forward.2} parent=11 // pred_fallthru
          _
      $region12: #{lstm_net_forward.2} parent=5 // pred_fallthru
        _
      %p256 = scmp.lt.s32.totalorder %s16, 4
      // Predicated region
      $region33: #{lstm_net_forward.2} parent=5 // pred_check
        %p257 = pneg %p256
      $region34: #{lstm_net_forward.2} parent=5 // pred_check_branch
        %259 = sbr.rel (%p257) target = $region36
      $region35: #{lstm_net_forward.2} parent=5 // pred_region
        // Predicated region
        $region37: #{lstm_net_forward.2} parent=35 // pred_check
          %p260 = pneg %p36
        $region38: #{lstm_net_forward.2} parent=35 // pred_check_branch
          %262 = sbr.rel (%p260) target = $region40
        $region39: #{lstm_net_forward.2} parent=35 // pred_region
          %s263 = smul.u32 2, %s16
          %p264 = scmp.lt.s32.totalorder %s263, 7
          %s265 = scalar_select %p264, %s263, 7
          %s266 = smul.addr %s265, 4
          %s267 = scalar_lea.vmem %s0, %s266
          %s268 = smul.u32 2, %s16
        $region40: #{lstm_net_forward.2} parent=35 // pred_fallthru
          _
      $region36: #{lstm_net_forward.2} parent=5 // pred_fallthru
        _
      %p269 = scmp.le.s32.totalorder 1, %s16
      %p270 = scmp.lt.s32.totalorder %s16, 5
      %p271 = pnand %p269, %p270
      %p272 = pneg %p271
      // Predicated region
      $region41: #{lstm_net_forward.2} parent=5 // pred_check
        _
      $region42: #{lstm_net_forward.2} parent=5 // pred_check_branch
        %274 = sbr.rel (%p271) target = $region44
      $region43: #{lstm_net_forward.2} parent=5 // pred_region
        %s275 = ssub.s32 %s16, 1
        // Predicated region
        $region45: #{lstm_net_forward.2} parent=43 // pred_check
          %p276 = pneg %p126
        $region46: #{lstm_net_forward.2} parent=43 // pred_check_branch
          %278 = sbr.rel (%p276) target = $region48
        $region47: #{lstm_net_forward.2} parent=43 // pred_region
          %280 = dma.done [#allocation6], 4096
        $region48: #{lstm_net_forward.2} parent=43 // pred_fallthru
          _
        %s281 = smul.u32 2, %s21
        %p282 = scmp.lt.s32.totalorder %s281, 7
        %s283 = scalar_select %p282, %s281, 7
        %s284 = smul.addr %s283, 4
        %s285 = scalar_lea.vmem %s0, %s284
        %p286 = pneg %p42
        %p287 = pneg %p39
        %p288 = pneg %p63
        %p289 = pneg %p60
        %p290 = pneg %p84
        %p291 = pneg %p81
        %p292 = pneg %p105
        %p293 = pneg %p102
        %p294 = pneg %p126
        %p295 = pneg %p123
        %p296 = pneg %p147
        %p297 = pneg %p144
        %p298 = pneg %p173
        %p299 = pneg %p170
        %s300 = smul.u32 2, %s21
        %p301 = scmp.lt.s32.totalorder %s300, 7
        %s302 = scalar_select %p301, %s300, 7
        %s303 = smul.addr %s302, 4
        %s304 = scalar_lea.vmem %s6, %s303
        %p305 = pneg %p194
        %p306 = pneg %p191
        %p307 = pneg %p215
        %p308 = pneg %p212
        %s309 = smul.u32 2, %s21
        %p310 = scmp.lt.s32.totalorder %s309, 7
        %s311 = scalar_select %p310, %s309, 7
        %s312 = smul.addr %s311, 4
        %s313 = scalar_lea.vmem %s0, %s312
        %s314 = smul.u32 2, %s21
        %s315 = smul.u32 2, %s21
        %p316 = scmp.lt.s32.totalorder %s315, 7
        %s317 = scalar_select %p316, %s315, 7
        %s318 = smul.addr %s317, 4
        %s319 = scalar_lea.vmem %s6, %s318
        %s320 = smul.u32 2, %s21
        %p322 = scmp.eq.s32.totalorder %s21, 0
        // Predicated region
        $region49: #{lstm_net_forward.2} parent=43 // pred_check
          %p323 = pneg %p322
        $region50: #{lstm_net_forward.2} parent=43 // pred_check_branch
          %325 = sbr.rel (%p323) target = $region52
        $region51: #{lstm_net_forward.2} parent=43 // pred_region
          %v326 = vld [vmem:[%s1] sm:$0xff]
          %327 = vst [vmem:[#allocation3] sm:$0xff] %v326
          %v328 = vld [vmem:[%s2] sm:$0xff]
          %329 = vst [vmem:[#allocation4] sm:$0xff] %v328
        $region52: #{lstm_net_forward.2} parent=43 // pred_fallthru
          _
        %v330 = vld [vmem:[%s313] sm:$0xf]
        %v331 = vld [vmem:[%s313 + $0x4] sm:$0xf]
        %v332 = vld [vmem:[%s3] sm:$0xff]
        %v333 = vld [vmem:[%s3 + $0x8] sm:$0xff]
        %v334 = vld [vmem:[%s3 + $0x10] sm:$0xff]
        %v335 = vld [vmem:[%s3 + $0x18] sm:$0xff]
        %v336 = vld [vmem:[%s5] sm:$0xf]
        %v338 = vperm.slane %v336, 0
        %v339 = vperm.slane %v336, 1
        %v340 = vperm.slane %v336, 2
        %v341 = vperm.slane %v336, 3
        %v348 = vunpack.c.l.b16 %v330
        %v349 = vunpack.c.l.b16 %v331
        %v350 = vpack.c.b16 %v349, %v348
        %v355 = vunpack.c.l.b16 %v332
        %v356 = vunpack.c.h.b16 %v332
        %v357 = vunpack.c.l.b16 %v333
        %v358 = vunpack.c.h.b16 %v333
        %v359 = vunpack.c.l.b16 %v334
        %v360 = vunpack.c.h.b16 %v334
        %v361 = vunpack.c.l.b16 %v335
        %v362 = vunpack.c.h.b16 %v335
        %v363 = vpack.c.b16 %v359, %v355
        %v364 = vpack.c.b16 %v360, %v356
        %v365 = vpack.c.b16 %v361, %v357
        %v366 = vpack.c.b16 %v362, %v358
        %vm371 = vcmask 130048
        %v373 = vsel %vm371, %v350, 0
        %375 = vmatpush.bf16.msra.mxu0 0
        %376 = vmatpush.bf16.msra.mxu0 0
        %377 = vmatpush.bf16.msra.mxu0 0
        %378 = vmatpush.bf16.msra.mxu0 0
        %379 = vmatpush.bf16.msra.mxu0 0
        %380 = vmatpush.bf16.msra.mxu0 0
        %381 = vmatpush.bf16.msra.mxu0 0
        %382 = vmatpush.bf16.msra.mxu0 %v363
        %383 = vmatmul.bf16.gmra.mxu0 %v373
        %v384 = vpop.f32.mrf.mxu0
        %v385 = vadd.f32 %v338, %v384
        %v386 = vpop.f32.mrf.mxu0
        %v387 = vadd.f32 %v338, %v386
        %388 = vdwg.mxu0
        %389 = vmatpush.bf16.msra.mxu0 0
        %390 = vmatpush.bf16.msra.mxu0 0
        %391 = vmatpush.bf16.msra.mxu0 0
        %392 = vmatpush.bf16.msra.mxu0 0
        %393 = vmatpush.bf16.msra.mxu0 0
        %394 = vmatpush.bf16.msra.mxu0 0
        %395 = vmatpush.bf16.msra.mxu0 0
        %396 = vmatpush.bf16.msra.mxu0 %v364
        %397 = vmatmul.bf16.gmra.mxu0 %v373
        %v398 = vpop.f32.mrf.mxu0
        %v399 = vadd.f32 %v339, %v398
        %v400 = vpop.f32.mrf.mxu0
        %v401 = vadd.f32 %v339, %v400
        %402 = vdwg.mxu0
        %403 = vmatpush.bf16.msra.mxu0 0
        %404 = vmatpush.bf16.msra.mxu0 0
        %405 = vmatpush.bf16.msra.mxu0 0
        %406 = vmatpush.bf16.msra.mxu0 0
        %407 = vmatpush.bf16.msra.mxu0 0
        %408 = vmatpush.bf16.msra.mxu0 0
        %409 = vmatpush.bf16.msra.mxu0 0
        %410 = vmatpush.bf16.msra.mxu0 %v365
        %411 = vmatmul.bf16.gmra.mxu0 %v373
        %v412 = vpop.f32.mrf.mxu0
        %v413 = vadd.f32 %v340, %v412
        %v414 = vpop.f32.mrf.mxu0
        %v415 = vadd.f32 %v340, %v414
        %416 = vdwg.mxu0
        %417 = vmatpush.bf16.msra.mxu0 0
        %418 = vmatpush.bf16.msra.mxu0 0
        %419 = vmatpush.bf16.msra.mxu0 0
        %420 = vmatpush.bf16.msra.mxu0 0
        %421 = vmatpush.bf16.msra.mxu0 0
        %422 = vmatpush.bf16.msra.mxu0 0
        %423 = vmatpush.bf16.msra.mxu0 0
        %424 = vmatpush.bf16.msra.mxu0 %v366
        %425 = vmatmul.bf16.gmra.mxu0 %v373
        %v426 = vpop.f32.mrf.mxu0
        %v427 = vadd.f32 %v341, %v426
        %v428 = vpop.f32.mrf.mxu0
        %v429 = vadd.f32 %v341, %v428
        %430 = vdwg.mxu0
        %431 = vst [vmem:[#allocation2] sm:$0xff] %v385
        %432 = vst [vmem:[#allocation2 + $0x8] sm:$0xff] %v399
        %433 = vst [vmem:[#allocation2 + $0x10] sm:$0xff] %v413
        %434 = vst [vmem:[#allocation2 + $0x18] sm:$0xff] %v427
        %435 = vst [vmem:[#allocation2 + $0x20] sm:$0xff] %v387
        %436 = vst [vmem:[#allocation2 + $0x28] sm:$0xff] %v401
        %437 = vst [vmem:[#allocation2 + $0x30] sm:$0xff] %v415
        %438 = vst [vmem:[#allocation2 + $0x38] sm:$0xff] %v429
        %v439 = vld [vmem:[#allocation3] sm:$0xff]
        %v440 = vld [vmem:[#allocation4] sm:$0xff]
        %s441 = smul.u32 0, 4
        %s442 = smul.addr %s441, 8
        %s443 = scalar_lea.vmem [#allocation2], %s442
        %v444 = vld [vmem:[%s443] sm:$0xff]
        %v445 = vld [vmem:[%s443 + $0x8] sm:$0xff]
        %v446 = vld [vmem:[%s443 + $0x10] sm:$0xff]
        %v447 = vld [vmem:[%s443 + $0x18] sm:$0xff]
        %v448 = vpack.c.bf16 %v439, %v439
        %v449 = vld [vmem:[#allocation5] sm:$0xff]
        %v450 = vld [vmem:[#allocation5 + $0x8] sm:$0xff]
        %v451 = vld [vmem:[#allocation5 + $0x10] sm:$0xff]
        %v452 = vld [vmem:[#allocation5 + $0x18] sm:$0xff]
        %v453 = vld [vmem:[#allocation5 + $0x20] sm:$0xff]
        %v454 = vld [vmem:[#allocation5 + $0x28] sm:$0xff]
        %v455 = vld [vmem:[#allocation5 + $0x30] sm:$0xff]
        %v456 = vld [vmem:[#allocation5 + $0x38] sm:$0xff]
        %v457 = vld [vmem:[#allocation5 + $0x40] sm:$0xff]
        %v458 = vld [vmem:[#allocation5 + $0x48] sm:$0xff]
        %v459 = vld [vmem:[#allocation5 + $0x50] sm:$0xff]
        %v460 = vld [vmem:[#allocation5 + $0x58] sm:$0xff]
        %v461 = vld [vmem:[#allocation5 + $0x60] sm:$0xff]
        %v462 = vld [vmem:[#allocation5 + $0x68] sm:$0xff]
        %v463 = vld [vmem:[#allocation5 + $0x70] sm:$0xff]
        %v464 = vld [vmem:[#allocation5 + $0x78] sm:$0xff]
        %v465 = vld [vmem:[#allocation5 + $0x80] sm:$0xff]
        %v466 = vld [vmem:[#allocation5 + $0x88] sm:$0xff]
        %v467 = vld [vmem:[#allocation5 + $0x90] sm:$0xff]
        %v468 = vld [vmem:[#allocation5 + $0x98] sm:$0xff]
        %v469 = vld [vmem:[#allocation5 + $0xa0] sm:$0xff]
        %v470 = vld [vmem:[#allocation5 + $0xa8] sm:$0xff]
        %v471 = vld [vmem:[#allocation5 + $0xb0] sm:$0xff]
        %v472 = vld [vmem:[#allocation5 + $0xb8] sm:$0xff]
        %v473 = vld [vmem:[#allocation5 + $0xc0] sm:$0xff]
        %v474 = vld [vmem:[#allocation5 + $0xc8] sm:$0xff]
        %v475 = vld [vmem:[#allocation5 + $0xd0] sm:$0xff]
        %v476 = vld [vmem:[#allocation5 + $0xd8] sm:$0xff]
        %v477 = vld [vmem:[#allocation5 + $0xe0] sm:$0xff]
        %v478 = vld [vmem:[#allocation5 + $0xe8] sm:$0xff]
        %v479 = vld [vmem:[#allocation5 + $0xf0] sm:$0xff]
        %v480 = vld [vmem:[#allocation5 + $0xf8] sm:$0xff]
        %v513 = vunpack.c.l.b16 %v449
        %v514 = vunpack.c.h.b16 %v449
        %v515 = vunpack.c.l.b16 %v450
        %v516 = vunpack.c.h.b16 %v450
        %v517 = vunpack.c.l.b16 %v451
        %v518 = vunpack.c.h.b16 %v451
        %v519 = vunpack.c.l.b16 %v452
        %v520 = vunpack.c.h.b16 %v452
        %v521 = vunpack.c.l.b16 %v453
        %v522 = vunpack.c.h.b16 %v453
        %v523 = vunpack.c.l.b16 %v454
        %v524 = vunpack.c.h.b16 %v454
        %v525 = vunpack.c.l.b16 %v455
        %v526 = vunpack.c.h.b16 %v455
        %v527 = vunpack.c.l.b16 %v456
        %v528 = vunpack.c.h.b16 %v456
        %v529 = vunpack.c.l.b16 %v457
        %v530 = vunpack.c.h.b16 %v457
        %v531 = vunpack.c.l.b16 %v458
        %v532 = vunpack.c.h.b16 %v458
        %v533 = vunpack.c.l.b16 %v459
        %v534 = vunpack.c.h.b16 %v459
        %v535 = vunpack.c.l.b16 %v460
        %v536 = vunpack.c.h.b16 %v460
        %v537 = vunpack.c.l.b16 %v461
        %v538 = vunpack.c.h.b16 %v461
        %v539 = vunpack.c.l.b16 %v462
        %v540 = vunpack.c.h.b16 %v462
        %v541 = vunpack.c.l.b16 %v463
        %v542 = vunpack.c.h.b16 %v463
        %v543 = vunpack.c.l.b16 %v464
        %v544 = vunpack.c.h.b16 %v464
        %v545 = vunpack.c.l.b16 %v465
        %v546 = vunpack.c.h.b16 %v465
        %v547 = vunpack.c.l.b16 %v466
        %v548 = vunpack.c.h.b16 %v466
        %v549 = vunpack.c.l.b16 %v467
        %v550 = vunpack.c.h.b16 %v467
        %v551 = vunpack.c.l.b16 %v468
        %v552 = vunpack.c.h.b16 %v468
        %v553 = vunpack.c.l.b16 %v469
        %v554 = vunpack.c.h.b16 %v469
        %v555 = vunpack.c.l.b16 %v470
        %v556 = vunpack.c.h.b16 %v470
        %v557 = vunpack.c.l.b16 %v471
        %v558 = vunpack.c.h.b16 %v471
        %v559 = vunpack.c.l.b16 %v472
        %v560 = vunpack.c.h.b16 %v472
        %v561 = vunpack.c.l.b16 %v473
        %v562 = vunpack.c.h.b16 %v473
        %v563 = vunpack.c.l.b16 %v474
        %v564 = vunpack.c.h.b16 %v474
        %v565 = vunpack.c.l.b16 %v475
        %v566 = vunpack.c.h.b16 %v475
        %v567 = vunpack.c.l.b16 %v476
        %v568 = vunpack.c.h.b16 %v476
        %v569 = vunpack.c.l.b16 %v477
        %v570 = vunpack.c.h.b16 %v477
        %v571 = vunpack.c.l.b16 %v478
        %v572 = vunpack.c.h.b16 %v478
        %v573 = vunpack.c.l.b16 %v479
        %v574 = vunpack.c.h.b16 %v479
        %v575 = vunpack.c.l.b16 %v480
        %v576 = vunpack.c.h.b16 %v480
        %v577 = vpack.c.b16 %v517, %v513
        %v578 = vpack.c.b16 %v518, %v514
        %v579 = vpack.c.b16 %v519, %v515
        %v580 = vpack.c.b16 %v520, %v516
        %v581 = vpack.c.b16 %v525, %v521
        %v582 = vpack.c.b16 %v526, %v522
        %v583 = vpack.c.b16 %v527, %v523
        %v584 = vpack.c.b16 %v528, %v524
        %v585 = vpack.c.b16 %v533, %v529
        %v586 = vpack.c.b16 %v534, %v530
        %v587 = vpack.c.b16 %v535, %v531
        %v588 = vpack.c.b16 %v536, %v532
        %v589 = vpack.c.b16 %v541, %v537
        %v590 = vpack.c.b16 %v542, %v538
        %v591 = vpack.c.b16 %v543, %v539
        %v592 = vpack.c.b16 %v544, %v540
        %v593 = vpack.c.b16 %v549, %v545
        %v594 = vpack.c.b16 %v550, %v546
        %v595 = vpack.c.b16 %v551, %v547
        %v596 = vpack.c.b16 %v552, %v548
        %v597 = vpack.c.b16 %v557, %v553
        %v598 = vpack.c.b16 %v558, %v554
        %v599 = vpack.c.b16 %v559, %v555
        %v600 = vpack.c.b16 %v560, %v556
        %v601 = vpack.c.b16 %v565, %v561
        %v602 = vpack.c.b16 %v566, %v562
        %v603 = vpack.c.b16 %v567, %v563
        %v604 = vpack.c.b16 %v568, %v564
        %v605 = vpack.c.b16 %v573, %v569
        %v606 = vpack.c.b16 %v574, %v570
        %v607 = vpack.c.b16 %v575, %v571
        %v608 = vpack.c.b16 %v576, %v572
        %641 = vmatpush.bf16.msra.mxu0 %v605
        %642 = vmatpush.bf16.msra.mxu0 %v601
        %643 = vmatpush.bf16.msra.mxu0 %v597
        %644 = vmatpush.bf16.msra.mxu0 %v593
        %645 = vmatpush.bf16.msra.mxu0 %v589
        %646 = vmatpush.bf16.msra.mxu0 %v585
        %647 = vmatpush.bf16.msra.mxu0 %v581
        %648 = vmatpush.bf16.msra.mxu0 %v577
        %649 = vmatmul.bf16.gmra.mxu0 %v448
        %v650 = vpop.f32.mrf.mxu0
        %v651 = vadd.f32 0.0, %v650
        %v652 = vpop.f32.mrf.mxu0
        %653 = vdwg.mxu0
        %654 = vmatpush.bf16.msra.mxu0 %v606
        %655 = vmatpush.bf16.msra.mxu0 %v602
        %656 = vmatpush.bf16.msra.mxu0 %v598
        %657 = vmatpush.bf16.msra.mxu0 %v594
        %658 = vmatpush.bf16.msra.mxu0 %v590
        %659 = vmatpush.bf16.msra.mxu0 %v586
        %660 = vmatpush.bf16.msra.mxu0 %v582
        %661 = vmatpush.bf16.msra.mxu0 %v578
        %662 = vmatmul.bf16.gmra.mxu0 %v448
        %v663 = vpop.f32.mrf.mxu0
        %v664 = vadd.f32 0.0, %v663
        %v665 = vpop.f32.mrf.mxu0
        %666 = vdwg.mxu0
        %667 = vmatpush.bf16.msra.mxu0 %v607
        %668 = vmatpush.bf16.msra.mxu0 %v603
        %669 = vmatpush.bf16.msra.mxu0 %v599
        %670 = vmatpush.bf16.msra.mxu0 %v595
        %671 = vmatpush.bf16.msra.mxu0 %v591
        %672 = vmatpush.bf16.msra.mxu0 %v587
        %673 = vmatpush.bf16.msra.mxu0 %v583
        %674 = vmatpush.bf16.msra.mxu0 %v579
        %675 = vmatmul.bf16.gmra.mxu0 %v448
        %v676 = vpop.f32.mrf.mxu0
        %v677 = vadd.f32 0.0, %v676
        %v678 = vpop.f32.mrf.mxu0
        %679 = vdwg.mxu0
        %680 = vmatpush.bf16.msra.mxu0 %v608
        %681 = vmatpush.bf16.msra.mxu0 %v604
        %682 = vmatpush.bf16.msra.mxu0 %v600
        %683 = vmatpush.bf16.msra.mxu0 %v596
        %684 = vmatpush.bf16.msra.mxu0 %v592
        %685 = vmatpush.bf16.msra.mxu0 %v588
        %686 = vmatpush.bf16.msra.mxu0 %v584
        %687 = vmatpush.bf16.msra.mxu0 %v580
        %688 = vmatmul.bf16.gmra.mxu0 %v448
        %v689 = vpop.f32.mrf.mxu0
        %v690 = vadd.f32 0.0, %v689
        %v691 = vpop.f32.mrf.mxu0
        %692 = vdwg.mxu0
        %v693 = vadd.f32 %v444, %v651
        %v694 = vadd.f32 %v445, %v664
        %v695 = vadd.f32 %v446, %v677
        %v696 = vadd.f32 %v447, %v690
        %v697 = vmul.f32 %v693, 0.5
        %v698 = vtanh.pop %v697
        %v699 = vmul.f32 %v698, 0.5
        %v700 = vadd.f32 %v699, 0.5
        %v701 = vmul.f32 %v694, 0.5
        %v702 = vtanh.pop %v701
        %v703 = vmul.f32 %v702, 0.5
        %v704 = vadd.f32 %v703, 0.5
        %v705 = vtanh.pop %v695
        %v706 = vmul.f32 %v696, 0.5
        %v707 = vtanh.pop %v706
        %v708 = vmul.f32 %v707, 0.5
        %v709 = vadd.f32 %v708, 0.5
        %v710 = vmul.f32 %v704, %v440
        %v711 = vmul.f32 %v700, %v705
        %v712 = vadd.f32 %v710, %v711
        %v713 = vtanh.pop %v712
        %v714 = vmul.f32 %v709, %v713
        %v715 = vpack.c.bf16 %v714, %v714
        %716 = vst [vmem:[%s319] sm:$0xf] %v715
        %s717 = smul.u32 1, 4
        %s718 = smul.addr %s717, 8
        %s719 = scalar_lea.vmem [#allocation2], %s718
        %v720 = vld [vmem:[%s719] sm:$0xff]
        %v721 = vld [vmem:[%s719 + $0x8] sm:$0xff]
        %v722 = vld [vmem:[%s719 + $0x10] sm:$0xff]
        %v723 = vld [vmem:[%s719 + $0x18] sm:$0xff]
        %v724 = vld [vmem:[#allocation5] sm:$0xff]
        %v725 = vld [vmem:[#allocation5 + $0x8] sm:$0xff]
        %v726 = vld [vmem:[#allocation5 + $0x10] sm:$0xff]
        %v727 = vld [vmem:[#allocation5 + $0x18] sm:$0xff]
        %v728 = vld [vmem:[#allocation5 + $0x20] sm:$0xff]
        %v729 = vld [vmem:[#allocation5 + $0x28] sm:$0xff]
        %v730 = vld [vmem:[#allocation5 + $0x30] sm:$0xff]
        %v731 = vld [vmem:[#allocation5 + $0x38] sm:$0xff]
        %v732 = vld [vmem:[#allocation5 + $0x40] sm:$0xff]
        %v733 = vld [vmem:[#allocation5 + $0x48] sm:$0xff]
        %v734 = vld [vmem:[#allocation5 + $0x50] sm:$0xff]
        %v735 = vld [vmem:[#allocation5 + $0x58] sm:$0xff]
        %v736 = vld [vmem:[#allocation5 + $0x60] sm:$0xff]
        %v737 = vld [vmem:[#allocation5 + $0x68] sm:$0xff]
        %v738 = vld [vmem:[#allocation5 + $0x70] sm:$0xff]
        %v739 = vld [vmem:[#allocation5 + $0x78] sm:$0xff]
        %v740 = vld [vmem:[#allocation5 + $0x80] sm:$0xff]
        %v741 = vld [vmem:[#allocation5 + $0x88] sm:$0xff]
        %v742 = vld [vmem:[#allocation5 + $0x90] sm:$0xff]
        %v743 = vld [vmem:[#allocation5 + $0x98] sm:$0xff]
        %v744 = vld [vmem:[#allocation5 + $0xa0] sm:$0xff]
        %v745 = vld [vmem:[#allocation5 + $0xa8] sm:$0xff]
        %v746 = vld [vmem:[#allocation5 + $0xb0] sm:$0xff]
        %v747 = vld [vmem:[#allocation5 + $0xb8] sm:$0xff]
        %v748 = vld [vmem:[#allocation5 + $0xc0] sm:$0xff]
        %v749 = vld [vmem:[#allocation5 + $0xc8] sm:$0xff]
        %v750 = vld [vmem:[#allocation5 + $0xd0] sm:$0xff]
        %v751 = vld [vmem:[#allocation5 + $0xd8] sm:$0xff]
        %v752 = vld [vmem:[#allocation5 + $0xe0] sm:$0xff]
        %v753 = vld [vmem:[#allocation5 + $0xe8] sm:$0xff]
        %v754 = vld [vmem:[#allocation5 + $0xf0] sm:$0xff]
        %v755 = vld [vmem:[#allocation5 + $0xf8] sm:$0xff]
        %v788 = vunpack.c.l.b16 %v724
        %v789 = vunpack.c.h.b16 %v724
        %v790 = vunpack.c.l.b16 %v725
        %v791 = vunpack.c.h.b16 %v725
        %v792 = vunpack.c.l.b16 %v726
        %v793 = vunpack.c.h.b16 %v726
        %v794 = vunpack.c.l.b16 %v727
        %v795 = vunpack.c.h.b16 %v727
        %v796 = vunpack.c.l.b16 %v728
        %v797 = vunpack.c.h.b16 %v728
        %v798 = vunpack.c.l.b16 %v729
        %v799 = vunpack.c.h.b16 %v729
        %v800 = vunpack.c.l.b16 %v730
        %v801 = vunpack.c.h.b16 %v730
        %v802 = vunpack.c.l.b16 %v731
        %v803 = vunpack.c.h.b16 %v731
        %v804 = vunpack.c.l.b16 %v732
        %v805 = vunpack.c.h.b16 %v732
        %v806 = vunpack.c.l.b16 %v733
        %v807 = vunpack.c.h.b16 %v733
        %v808 = vunpack.c.l.b16 %v734
        %v809 = vunpack.c.h.b16 %v734
        %v810 = vunpack.c.l.b16 %v735
        %v811 = vunpack.c.h.b16 %v735
        %v812 = vunpack.c.l.b16 %v736
        %v813 = vunpack.c.h.b16 %v736
        %v814 = vunpack.c.l.b16 %v737
        %v815 = vunpack.c.h.b16 %v737
        %v816 = vunpack.c.l.b16 %v738
        %v817 = vunpack.c.h.b16 %v738
        %v818 = vunpack.c.l.b16 %v739
        %v819 = vunpack.c.h.b16 %v739
        %v820 = vunpack.c.l.b16 %v740
        %v821 = vunpack.c.h.b16 %v740
        %v822 = vunpack.c.l.b16 %v741
        %v823 = vunpack.c.h.b16 %v741
        %v824 = vunpack.c.l.b16 %v742
        %v825 = vunpack.c.h.b16 %v742
        %v826 = vunpack.c.l.b16 %v743
        %v827 = vunpack.c.h.b16 %v743
        %v828 = vunpack.c.l.b16 %v744
        %v829 = vunpack.c.h.b16 %v744
        %v830 = vunpack.c.l.b16 %v745
        %v831 = vunpack.c.h.b16 %v745
        %v832 = vunpack.c.l.b16 %v746
        %v833 = vunpack.c.h.b16 %v746
        %v834 = vunpack.c.l.b16 %v747
        %v835 = vunpack.c.h.b16 %v747
        %v836 = vunpack.c.l.b16 %v748
        %v837 = vunpack.c.h.b16 %v748
        %v838 = vunpack.c.l.b16 %v749
        %v839 = vunpack.c.h.b16 %v749
        %v840 = vunpack.c.l.b16 %v750
        %v841 = vunpack.c.h.b16 %v750
        %v842 = vunpack.c.l.b16 %v751
        %v843 = vunpack.c.h.b16 %v751
        %v844 = vunpack.c.l.b16 %v752
        %v845 = vunpack.c.h.b16 %v752
        %v846 = vunpack.c.l.b16 %v753
        %v847 = vunpack.c.h.b16 %v753
        %v848 = vunpack.c.l.b16 %v754
        %v849 = vunpack.c.h.b16 %v754
        %v850 = vunpack.c.l.b16 %v755
        %v851 = vunpack.c.h.b16 %v755
        %v852 = vpack.c.b16 %v792, %v788
        %v853 = vpack.c.b16 %v793, %v789
        %v854 = vpack.c.b16 %v794, %v790
        %v855 = vpack.c.b16 %v795, %v791
        %v856 = vpack.c.b16 %v800, %v796
        %v857 = vpack.c.b16 %v801, %v797
        %v858 = vpack.c.b16 %v802, %v798
        %v859 = vpack.c.b16 %v803, %v799
        %v860 = vpack.c.b16 %v808, %v804
        %v861 = vpack.c.b16 %v809, %v805
        %v862 = vpack.c.b16 %v810, %v806
        %v863 = vpack.c.b16 %v811, %v807
        %v864 = vpack.c.b16 %v816, %v812
        %v865 = vpack.c.b16 %v817, %v813
        %v866 = vpack.c.b16 %v818, %v814
        %v867 = vpack.c.b16 %v819, %v815
        %v868 = vpack.c.b16 %v824, %v820
        %v869 = vpack.c.b16 %v825, %v821
        %v870 = vpack.c.b16 %v826, %v822
        %v871 = vpack.c.b16 %v827, %v823
        %v872 = vpack.c.b16 %v832, %v828
        %v873 = vpack.c.b16 %v833, %v829
        %v874 = vpack.c.b16 %v834, %v830
        %v875 = vpack.c.b16 %v835, %v831
        %v876 = vpack.c.b16 %v840, %v836
        %v877 = vpack.c.b16 %v841, %v837
        %v878 = vpack.c.b16 %v842, %v838
        %v879 = vpack.c.b16 %v843, %v839
        %v880 = vpack.c.b16 %v848, %v844
        %v881 = vpack.c.b16 %v849, %v845
        %v882 = vpack.c.b16 %v850, %v846
        %v883 = vpack.c.b16 %v851, %v847
        %916 = vmatpush.bf16.msra.mxu0 %v880
        %917 = vmatpush.bf16.msra.mxu0 %v876
        %918 = vmatpush.bf16.msra.mxu0 %v872
        %919 = vmatpush.bf16.msra.mxu0 %v868
        %920 = vmatpush.bf16.msra.mxu0 %v864
        %921 = vmatpush.bf16.msra.mxu0 %v860
        %922 = vmatpush.bf16.msra.mxu0 %v856
        %923 = vmatpush.bf16.msra.mxu0 %v852
        %924 = vmatmul.bf16.gmra.mxu0 %v715
        %v925 = vpop.f32.mrf.mxu0
        %v926 = vadd.f32 0.0, %v925
        %v927 = vpop.f32.mrf.mxu0
        %928 = vdwg.mxu0
        %929 = vmatpush.bf16.msra.mxu0 %v881
        %930 = vmatpush.bf16.msra.mxu0 %v877
        %931 = vmatpush.bf16.msra.mxu0 %v873
        %932 = vmatpush.bf16.msra.mxu0 %v869
        %933 = vmatpush.bf16.msra.mxu0 %v865
        %934 = vmatpush.bf16.msra.mxu0 %v861
        %935 = vmatpush.bf16.msra.mxu0 %v857
        %936 = vmatpush.bf16.msra.mxu0 %v853
        %937 = vmatmul.bf16.gmra.mxu0 %v715
        %v938 = vpop.f32.mrf.mxu0
        %v939 = vadd.f32 0.0, %v938
        %v940 = vpop.f32.mrf.mxu0
        %941 = vdwg.mxu0
        %942 = vmatpush.bf16.msra.mxu0 %v882
        %943 = vmatpush.bf16.msra.mxu0 %v878
        %944 = vmatpush.bf16.msra.mxu0 %v874
        %945 = vmatpush.bf16.msra.mxu0 %v870
        %946 = vmatpush.bf16.msra.mxu0 %v866
        %947 = vmatpush.bf16.msra.mxu0 %v862
        %948 = vmatpush.bf16.msra.mxu0 %v858
        %949 = vmatpush.bf16.msra.mxu0 %v854
        %950 = vmatmul.bf16.gmra.mxu0 %v715
        %v951 = vpop.f32.mrf.mxu0
        %v952 = vadd.f32 0.0, %v951
        %v953 = vpop.f32.mrf.mxu0
        %954 = vdwg.mxu0
        %955 = vmatpush.bf16.msra.mxu0 %v883
        %956 = vmatpush.bf16.msra.mxu0 %v879
        %957 = vmatpush.bf16.msra.mxu0 %v875
        %958 = vmatpush.bf16.msra.mxu0 %v871
        %959 = vmatpush.bf16.msra.mxu0 %v867
        %960 = vmatpush.bf16.msra.mxu0 %v863
        %961 = vmatpush.bf16.msra.mxu0 %v859
        %962 = vmatpush.bf16.msra.mxu0 %v855
        %963 = vmatmul.bf16.gmra.mxu0 %v715
        %v964 = vpop.f32.mrf.mxu0
        %v965 = vadd.f32 0.0, %v964
        %v966 = vpop.f32.mrf.mxu0
        %967 = vdwg.mxu0
        %v968 = vadd.f32 %v720, %v926
        %v969 = vadd.f32 %v721, %v939
        %v970 = vadd.f32 %v722, %v952
        %v971 = vadd.f32 %v723, %v965
        %v972 = vmul.f32 %v968, 0.5
        %v973 = vtanh.pop %v972
        %v974 = vmul.f32 %v973, 0.5
        %v975 = vadd.f32 %v974, 0.5
        %v976 = vmul.f32 %v969, 0.5
        %v977 = vtanh.pop %v976
        %v978 = vmul.f32 %v977, 0.5
        %v979 = vadd.f32 %v978, 0.5
        %v980 = vtanh.pop %v970
        %v981 = vmul.f32 %v971, 0.5
        %v982 = vtanh.pop %v981
        %v983 = vmul.f32 %v982, 0.5
        %v984 = vadd.f32 %v983, 0.5
        %v985 = vmul.f32 %v979, %v712
        %v986 = vmul.f32 %v975, %v980
        %v987 = vadd.f32 %v985, %v986
        %v988 = vtanh.pop %v987
        %v989 = vmul.f32 %v984, %v988
        %v990 = vpack.c.bf16 %v989, %v989
        %s991 = scalar_lea.vmem %s319, 4
        %992 = vst [vmem:[%s991] sm:$0xf] %v990
        %993 = vst [vmem:[#allocation3] sm:$0xff] %v989
        %994 = vst [vmem:[#allocation4] sm:$0xff] %v987
        %p995 = scmp.eq.s32.totalorder %s21, 3
        // Predicated region
        $region53: #{lstm_net_forward.2} parent=43 // pred_check
          %p996 = pneg %p995
        $region54: #{lstm_net_forward.2} parent=43 // pred_check_branch
          %998 = sbr.rel (%p996) target = $region56
        $region55: #{lstm_net_forward.2} parent=43 // pred_region
          %999 = vst [vmem:[%s7] sm:$0xff] %v989
          %1000 = vst [vmem:[%s8] sm:$0xff] %v987
        $region56: #{lstm_net_forward.2} parent=43 // pred_fallthru
          _
        %s1001 = smul.u32 2, %s21
        %p1002 = scmp.lt.s32.totalorder %s1001, 7
        %s1003 = scalar_select %p1002, %s1001, 7
        %s1004 = smul.addr %s1003, 4
        %s1005 = scalar_lea.vmem %s6, %s1004
        // Predicated region
        $region57: #{lstm_net_forward.2} parent=43 // pred_check
          %p1006 = pneg %p170
        $region58: #{lstm_net_forward.2} parent=43 // pred_check_branch
          %1008 = sbr.rel (%p1006) target = $region60
        $region59: #{lstm_net_forward.2} parent=43 // pred_region
          %s1009 = smul.u32 2, %s21
        $region60: #{lstm_net_forward.2} parent=43 // pred_fallthru
          _
        // Predicated region
        $region61: #{lstm_net_forward.2} parent=43 // pred_check
          %p1010 = pneg %p191
        $region62: #{lstm_net_forward.2} parent=43 // pred_check_branch
          %1012 = sbr.rel (%p1010) target = $region64
        $region63: #{lstm_net_forward.2} parent=43 // pred_region
          _
        $region64: #{lstm_net_forward.2} parent=43 // pred_fallthru
          _
        // Predicated region
        $region65: #{lstm_net_forward.2} parent=43 // pred_check
          %p1013 = pneg %p212
        $region66: #{lstm_net_forward.2} parent=43 // pred_check_branch
          %1015 = sbr.rel (%p1013) target = $region68
        $region67: #{lstm_net_forward.2} parent=43 // pred_region
          _
        $region68: #{lstm_net_forward.2} parent=43 // pred_fallthru
          _
        // Predicated region
        $region69: #{lstm_net_forward.2} parent=43 // pred_check
          %p1016 = pneg %p191
        $region70: #{lstm_net_forward.2} parent=43 // pred_check_branch
          %1018 = sbr.rel (%p1016) target = $region72
        $region71: #{lstm_net_forward.2} parent=43 // pred_region
          _
        $region72: #{lstm_net_forward.2} parent=43 // pred_fallthru
          _
        // Predicated region
        $region73: #{lstm_net_forward.2} parent=43 // pred_check
          %p1019 = pneg %p212
        $region74: #{lstm_net_forward.2} parent=43 // pred_check_branch
          %1021 = sbr.rel (%p1019) target = $region76
        $region75: #{lstm_net_forward.2} parent=43 // pred_region
          _
        $region76: #{lstm_net_forward.2} parent=43 // pred_fallthru
          _
      $region44: #{lstm_net_forward.2} parent=5 // pred_fallthru
        _
      %p1022 = scmp.le.s32.totalorder 2, %s16
      // Predicated region
      $region77: #{lstm_net_forward.2} parent=5 // pred_check
        %p1023 = pneg %p1022
      $region78: #{lstm_net_forward.2} parent=5 // pred_check_branch
        %1025 = sbr.rel (%p1023) target = $region80
      $region79: #{lstm_net_forward.2} parent=5 // pred_region
        %s1026 = ssub.s32 %s16, 2
        // Predicated region
        $region81: #{lstm_net_forward.2} parent=79 // pred_check
          %p1027 = pneg %p176
        $region82: #{lstm_net_forward.2} parent=79 // pred_check_branch
          %1029 = sbr.rel (%p1027) target = $region84
        $region83: #{lstm_net_forward.2} parent=79 // pred_region
          %s1030 = smul.u32 2, %s22
          %p1031 = scmp.lt.s32.totalorder %s1030, 7
          %s1032 = scalar_select %p1031, %s1030, 7
          %s1033 = smul.addr %s1032, 4
          %s1034 = scalar_lea.vmem %s6, %s1033
        $region84: #{lstm_net_forward.2} parent=79 // pred_fallthru
          _
      $region80: #{lstm_net_forward.2} parent=5 // pred_fallthru
        _
    $region6: #{lstm_net_forward.2} parent=1 // loop_footer
      %s20 = sadd.s32 1, %s16
    $region7: #{lstm_net_forward.2} parent=1 // loop_footer_branch
      %15 = sbr.rel target = $region3
    $region8: #{lstm_net_forward.2} parent=1 // loop_exit
      _
    %1035 = vsyncpa [#allocation6], 1
    %s1036 = scalar_lea.sflag [#allocation6], 1
    %1037 = vsyncpa %s1036, 1

// kernel: lstm_net_forward.3
$region0: #{lstm_net_forward.3}
  #allocation0 [shape = 'u32[]', space=smem, size = 0x4, offset = 0x4, fixed_abs, tag = 'smem constant byte address 0x4 - core index']
  #allocation1 [shape = 'u32[72,128]{1,0:T(1,128)}', space=vmem, size = 0x9000, scoped, tag = 'internal scratch']
  #allocation2 [shape = 'f32[16,512]{1,0:T(8,128)}', space=vmem, size = 0x8000, scoped, tag = 'scratch operand']
  #allocation3 [shape = 'f32[8,128]{1,0:T(8,128)}', space=vmem, size = 0x1000, scoped, tag = 'scratch operand']
  #allocation4 [shape = 'f32[8,128]{1,0:T(8,128)}', space=vmem, size = 0x1000, scoped, tag = 'scratch operand']
  %s0 = inlined_call_operand.vmem [shape: bf16[64,128], index: 0, kind: input, shape index: {}]
  %s1 = inlined_call_operand.vmem [shape: f32[8,128], index: 1, kind: input, shape index: {}]
  %s2 = inlined_call_operand.vmem [shape: f32[8,128], index: 2, kind: input, shape index: {}]
  %s3 = inlined_call_operand.hbm [shape: bf16[128,512], index: 3, kind: input, shape index: {}]
  %s4 = inlined_call_operand.hbm [shape: bf16[128,512], index: 4, kind: input, shape index: {}]
  %s5 = inlined_call_operand.vmem [shape: f32[1,512], index: 5, kind: input, shape index: {}]
  %s6 = inlined_call_operand.vmem [shape: bf16[128,4], index: 6, kind: input, shape index: {}]
  %s7 = inlined_call_operand.vmem [shape: f32[1,4], index: 7, kind: input, shape index: {}]
  %s8 = inlined_call_operand.vmem [shape: f32[8,4], index: 8, kind: output, shape index: {0}]
  %s9 = inlined_call_operand.vmem [shape: f32[8,128], index: 9, kind: output, shape index: {1}]
  %s10 = inlined_call_operand.vmem [shape: f32[8,128], index: 10, kind: output, shape index: {2}]
  %11 = xla_tuple %s8, %s9, %s10
  %s12 = sld [smem:[#allocation0]]
  $region97: #{lstm_net_forward.3} parent=0
    _
  %s14 = ssub.s32 1, %s12
  %s15 = scalar_select 0, %s14, %s12
  $region1: #{lstm_net_forward.3} parent=0
    #allocation5 [shape = 'u8[131072]{0}', space=vmem, size = 0x20000, scoped, tag = 'input window, operand 3, single buffered']
    #allocation6 [shape = 's32[2]{0}', space=sflag, size = 0x8, scoped, tag = 'scoped memory for lstm_net_forward.3']
    #allocation7 [shape = 'u8[131072]{0}', space=vmem, size = 0x20000, scoped, tag = 'input window, operand 4, single buffered']
    #allocation8 [shape = 's32[1]{0}', space=sflag, size = 0x4, scoped, tag = 'scoped memory for lstm_net_forward.3']
    %16 = vsyncpa [#allocation6], 0
    %17 = vsyncpa [#allocation8], 0
    loop: start=0, step=1, limit=6
    $region2: #{lstm_net_forward.3} parent=1 // loop_pre_header
      _
    $region3: #{lstm_net_forward.3} parent=1 // loop_header
      %s19 = sphi 0, %s23
      %p20 = scmp.ge.s32.totalorder %s19, 6
      %s29 = sphi 0, %s31
      %s32 = sphi 0, %s29
      %s33 = sphi 0, %s32
      %s49 = sphi 0, %s33
      %s53 = sphi 0, %s53
      %s55 = sphi 0, %s53
      %s56 = sphi 0, %s55
      %s70 = sphi 0, %s56
      %s74 = sphi 0, %s74
      %s76 = sphi 0, %s74
      %s77 = sphi 0, %s76
      %s91 = sphi 0, %s77
      %s95 = sphi 0, %s95
      %s97 = sphi 0, %s95
      %s98 = sphi 0, %s97
      %s112 = sphi 0, %s98
      %s116 = sphi 0, %s116
      %s118 = sphi 0, %s116
      %s119 = sphi 0, %s118
      %s133 = sphi 0, %s119
      %s137 = sphi 0, %s137
      %s139 = sphi 0, %s137
      %s140 = sphi 0, %s139
      %s154 = sphi 0, %s140
      %s158 = sphi 0, %s158
      %s160 = sphi 0, %s158
      %s161 = sphi 0, %s160
      %s175 = sphi 0, %s161
      %s179 = sphi 0, %s179
      %s181 = sphi 0, %s179
      %s182 = sphi 0, %s181
      %s196 = sphi 0, %s182
      %s200 = sphi 0, %s200
      %s202 = sphi 0, %s200
      %s203 = sphi 0, %s202
      %s217 = sphi 0, %s203
      %s221 = sphi 0, %s221
      %s223 = sphi 0, %s221
      %s224 = sphi 0, %s223
      %s238 = sphi 0, %s224
      %s242 = sphi 0, %s242
      %s244 = sphi 0, %s242
      %s245 = sphi 0, %s244
      %s259 = sphi 0, %s245
    $region4: #{lstm_net_forward.3} parent=1 // loop_header_branch
      %22 = sbr.rel (%p20) target = $region8
    $region5: #{lstm_net_forward.3} parent=1 // loop_body
      %s24 = ssub.s32 %s19, 1
      %s25 = ssub.s32 %s19, 2
      %s26 = sadd.s32 %s19, 1
      %s27 = ssub.s32 %s19, %s26
      %p28 = scmp.eq.s32.totalorder %s27, 0
      %s30 = sadd.s32 %s29, 1
      %s31 = scalar_select %p28, %s29, %s30
      %p34 = pneg %p28
      %p35 = scmp.eq.s32.totalorder %s19, 3
      %p36 = por %p34, %p35
      %p37 = scmp.ne.s32.totalorder %s29, %s32
      %p38 = scmp.eq.s32.totalorder %s19, 0
      %p39 = por %p37, %p38
      %p40 = scmp.ne.s32.totalorder %s29, %s32
      %p41 = scmp.eq.s32.totalorder %s24, 3
      %p42 = por %p40, %p41
      %p43 = scmp.ne.s32.totalorder %s32, %s33
      %p44 = scmp.eq.s32.totalorder %s24, 0
      %p45 = por %p43, %p44
      %p46 = scmp.ne.s32.totalorder %s32, %s33
      %p47 = scmp.eq.s32.totalorder %s25, 3
      %p48 = por %p46, %p47
      %p50 = scmp.ne.s32.totalorder %s33, %s49
      %p51 = scmp.eq.s32.totalorder %s25, 0
      %p52 = por %p50, %p51
      %s54 = sadd.s32 %s53, 1
      %p57 = scmp.eq.s32.totalorder %s19, 3
      %p58 = scmp.ne.s32.totalorder %s53, %s55
      %p59 = scmp.eq.s32.totalorder %s19, 0
      %p60 = por %p58, %p59
      %p61 = scmp.ne.s32.totalorder %s53, %s55
      %p62 = scmp.eq.s32.totalorder %s24, 3
      %p63 = por %p61, %p62
      %p64 = scmp.ne.s32.totalorder %s55, %s56
      %p65 = scmp.eq.s32.totalorder %s24, 0
      %p66 = por %p64, %p65
      %p67 = scmp.ne.s32.totalorder %s55, %s56
      %p68 = scmp.eq.s32.totalorder %s25, 3
      %p69 = por %p67, %p68
      %p71 = scmp.ne.s32.totalorder %s56, %s70
      %p72 = scmp.eq.s32.totalorder %s25, 0
      %p73 = por %p71, %p72
      %s75 = sadd.s32 %s74, 1
      %p78 = scmp.eq.s32.totalorder %s19, 3
      %p79 = scmp.ne.s32.totalorder %s74, %s76
      %p80 = scmp.eq.s32.totalorder %s19, 0
      %p81 = por %p79, %p80
      %p82 = scmp.ne.s32.totalorder %s74, %s76
      %p83 = scmp.eq.s32.totalorder %s24, 3
      %p84 = por %p82, %p83
      %p85 = scmp.ne.s32.totalorder %s76, %s77
      %p86 = scmp.eq.s32.totalorder %s24, 0
      %p87 = por %p85, %p86
      %p88 = scmp.ne.s32.totalorder %s76, %s77
      %p89 = scmp.eq.s32.totalorder %s25, 3
      %p90 = por %p88, %p89
      %p92 = scmp.ne.s32.totalorder %s77, %s91
      %p93 = scmp.eq.s32.totalorder %s25, 0
      %p94 = por %p92, %p93
      %s96 = sadd.s32 %s95, 1
      %p99 = scmp.eq.s32.totalorder %s19, 3
      %p100 = scmp.ne.s32.totalorder %s95, %s97
      %p101 = scmp.eq.s32.totalorder %s19, 0
      %p102 = por %p100, %p101
      %p103 = scmp.ne.s32.totalorder %s95, %s97
      %p104 = scmp.eq.s32.totalorder %s24, 3
      %p105 = por %p103, %p104
      %p106 = scmp.ne.s32.totalorder %s97, %s98
      %p107 = scmp.eq.s32.totalorder %s24, 0
      %p108 = por %p106, %p107
      %p109 = scmp.ne.s32.totalorder %s97, %s98
      %p110 = scmp.eq.s32.totalorder %s25, 3
      %p111 = por %p109, %p110
      %p113 = scmp.ne.s32.totalorder %s98, %s112
      %p114 = scmp.eq.s32.totalorder %s25, 0
      %p115 = por %p113, %p114
      %s117 = sadd.s32 %s116, 1
      %p120 = scmp.eq.s32.totalorder %s19, 3
      %p121 = scmp.ne.s32.totalorder %s116, %s118
      %p122 = scmp.eq.s32.totalorder %s19, 0
      %p123 = por %p121, %p122
      %p124 = scmp.ne.s32.totalorder %s116, %s118
      %p125 = scmp.eq.s32.totalorder %s24, 3
      %p126 = por %p124, %p125
      %p127 = scmp.ne.s32.totalorder %s118, %s119
      %p128 = scmp.eq.s32.totalorder %s24, 0
      %p129 = por %p127, %p128
      %p130 = scmp.ne.s32.totalorder %s118, %s119
      %p131 = scmp.eq.s32.totalorder %s25, 3
      %p132 = por %p130, %p131
      %p134 = scmp.ne.s32.totalorder %s119, %s133
      %p135 = scmp.eq.s32.totalorder %s25, 0
      %p136 = por %p134, %p135
      %s138 = sadd.s32 %s137, 1
      %p141 = scmp.eq.s32.totalorder %s19, 3
      %p142 = scmp.ne.s32.totalorder %s137, %s139
      %p143 = scmp.eq.s32.totalorder %s19, 0
      %p144 = por %p142, %p143
      %p145 = scmp.ne.s32.totalorder %s137, %s139
      %p146 = scmp.eq.s32.totalorder %s24, 3
      %p147 = por %p145, %p146
      %p148 = scmp.ne.s32.totalorder %s139, %s140
      %p149 = scmp.eq.s32.totalorder %s24, 0
      %p150 = por %p148, %p149
      %p151 = scmp.ne.s32.totalorder %s139, %s140
      %p152 = scmp.eq.s32.totalorder %s25, 3
      %p153 = por %p151, %p152
      %p155 = scmp.ne.s32.totalorder %s140, %s154
      %p156 = scmp.eq.s32.totalorder %s25, 0
      %p157 = por %p155, %p156
      %s159 = sadd.s32 %s158, 1
      %p162 = scmp.eq.s32.totalorder %s19, 3
      %p163 = scmp.ne.s32.totalorder %s158, %s160
      %p164 = scmp.eq.s32.totalorder %s19, 0
      %p165 = por %p163, %p164
      %p166 = scmp.ne.s32.totalorder %s158, %s160
      %p167 = scmp.eq.s32.totalorder %s24, 3
      %p168 = por %p166, %p167
      %p169 = scmp.ne.s32.totalorder %s160, %s161
      %p170 = scmp.eq.s32.totalorder %s24, 0
      %p171 = por %p169, %p170
      %p172 = scmp.ne.s32.totalorder %s160, %s161
      %p173 = scmp.eq.s32.totalorder %s25, 3
      %p174 = por %p172, %p173
      %p176 = scmp.ne.s32.totalorder %s161, %s175
      %p177 = scmp.eq.s32.totalorder %s25, 0
      %p178 = por %p176, %p177
      %s180 = sadd.s32 %s179, 1
      %p183 = scmp.eq.s32.totalorder %s19, 3
      %p184 = scmp.ne.s32.totalorder %s179, %s181
      %p185 = scmp.eq.s32.totalorder %s19, 0
      %p186 = por %p184, %p185
      %p187 = scmp.ne.s32.totalorder %s179, %s181
      %p188 = scmp.eq.s32.totalorder %s24, 3
      %p189 = por %p187, %p188
      %p190 = scmp.ne.s32.totalorder %s181, %s182
      %p191 = scmp.eq.s32.totalorder %s24, 0
      %p192 = por %p190, %p191
      %p193 = scmp.ne.s32.totalorder %s181, %s182
      %p194 = scmp.eq.s32.totalorder %s25, 3
      %p195 = por %p193, %p194
      %p197 = scmp.ne.s32.totalorder %s182, %s196
      %p198 = scmp.eq.s32.totalorder %s25, 0
      %p199 = por %p197, %p198
      %s201 = sadd.s32 %s200, 1
      %p204 = scmp.eq.s32.totalorder %s19, 3
      %p205 = scmp.ne.s32.totalorder %s200, %s202
      %p206 = scmp.eq.s32.totalorder %s19, 0
      %p207 = por %p205, %p206
      %p208 = scmp.ne.s32.totalorder %s200, %s202
      %p209 = scmp.eq.s32.totalorder %s24, 3
      %p210 = por %p208, %p209
      %p211 = scmp.ne.s32.totalorder %s202, %s203
      %p212 = scmp.eq.s32.totalorder %s24, 0
      %p213 = por %p211, %p212
      %p214 = scmp.ne.s32.totalorder %s202, %s203
      %p215 = scmp.eq.s32.totalorder %s25, 3
      %p216 = por %p214, %p215
      %p218 = scmp.ne.s32.totalorder %s203, %s217
      %p219 = scmp.eq.s32.totalorder %s25, 0
      %p220 = por %p218, %p219
      %s222 = sadd.s32 %s221, 1
      %p225 = scmp.eq.s32.totalorder %s19, 3
      %p226 = scmp.ne.s32.totalorder %s221, %s223
      %p227 = scmp.eq.s32.totalorder %s19, 0
      %p228 = por %p226, %p227
      %p229 = scmp.ne.s32.totalorder %s221, %s223
      %p230 = scmp.eq.s32.totalorder %s24, 3
      %p231 = por %p229, %p230
      %p232 = scmp.ne.s32.totalorder %s223, %s224
      %p233 = scmp.eq.s32.totalorder %s24, 0
      %p234 = por %p232, %p233
      %p235 = scmp.ne.s32.totalorder %s223, %s224
      %p236 = scmp.eq.s32.totalorder %s25, 3
      %p237 = por %p235, %p236
      %p239 = scmp.ne.s32.totalorder %s224, %s238
      %p240 = scmp.eq.s32.totalorder %s25, 0
      %p241 = por %p239, %p240
      %s243 = sadd.s32 %s242, 1
      %p246 = scmp.eq.s32.totalorder %s19, 3
      %p247 = scmp.ne.s32.totalorder %s242, %s244
      %p248 = scmp.eq.s32.totalorder %s19, 0
      %p249 = por %p247, %p248
      %p250 = scmp.ne.s32.totalorder %s242, %s244
      %p251 = scmp.eq.s32.totalorder %s24, 3
      %p252 = por %p250, %p251
      %p253 = scmp.ne.s32.totalorder %s244, %s245
      %p254 = scmp.eq.s32.totalorder %s24, 0
      %p255 = por %p253, %p254
      %p256 = scmp.ne.s32.totalorder %s244, %s245
      %p257 = scmp.eq.s32.totalorder %s25, 3
      %p258 = por %p256, %p257
      %p260 = scmp.ne.s32.totalorder %s245, %s259
      %p261 = scmp.eq.s32.totalorder %s25, 0
      %p262 = por %p260, %p261
      %p263 = scmp.le.s32.totalorder 1, %s19
      %p264 = scmp.lt.s32.totalorder %s19, 5
      %p265 = pnand %p263, %p264
      %p266 = pneg %p265
      // Predicated region
      $region9: #{lstm_net_forward.3} parent=5 // pred_check
        _
      $region10: #{lstm_net_forward.3} parent=5 // pred_check_branch
        %268 = sbr.rel (%p265) target = $region12
      $region11: #{lstm_net_forward.3} parent=5 // pred_region
        %s269 = ssub.s32 %s19, 1
        // Predicated region
        $region13: #{lstm_net_forward.3} parent=11 // pred_check
          %p270 = pneg %p66
        $region14: #{lstm_net_forward.3} parent=11 // pred_check_branch
          %272 = sbr.rel (%p270) target = $region16
        $region15: #{lstm_net_forward.3} parent=11 // pred_region
          _
        $region16: #{lstm_net_forward.3} parent=11 // pred_fallthru
          _
        // Predicated region
        $region17: #{lstm_net_forward.3} parent=11 // pred_check
          %p273 = pneg %p87
        $region18: #{lstm_net_forward.3} parent=11 // pred_check_branch
          %275 = sbr.rel (%p273) target = $region20
        $region19: #{lstm_net_forward.3} parent=11 // pred_region
          _
        $region20: #{lstm_net_forward.3} parent=11 // pred_fallthru
          _
        // Predicated region
        $region21: #{lstm_net_forward.3} parent=11 // pred_check
          %p276 = pneg %p108
        $region22: #{lstm_net_forward.3} parent=11 // pred_check_branch
          %278 = sbr.rel (%p276) target = $region24
        $region23: #{lstm_net_forward.3} parent=11 // pred_region
          %280 = vsyncadd [#allocation6], 0
          %s281 = sshll.u32 %s3, 4
          %s282 = int_to_ptr.hbm [resolvable:$true] %s281
          %s283 = sshll.u32 [#allocation5], 4
          %s284 = int_to_ptr.vmem [resolvable:$true] %s283
          %289 = dma.hbm_to_vmem [thread:$0]  %s282, 4096, %s284, [#allocation6], 256, 256, 16
        $region24: #{lstm_net_forward.3} parent=11 // pred_fallthru
          _
        // Predicated region
        $region25: #{lstm_net_forward.3} parent=11 // pred_check
          %p290 = pneg %p129
        $region26: #{lstm_net_forward.3} parent=11 // pred_check_branch
          %292 = sbr.rel (%p290) target = $region28
        $region27: #{lstm_net_forward.3} parent=11 // pred_region
          %294 = vsyncadd [#allocation8], 0
          %s295 = sshll.u32 %s4, 4
          %s296 = int_to_ptr.hbm [resolvable:$true] %s295
          %s297 = sshll.u32 [#allocation7], 4
          %s298 = int_to_ptr.vmem [resolvable:$true] %s297
          %303 = dma.hbm_to_vmem [thread:$0]  %s296, 4096, %s298, [#allocation8], 256, 256, 16
        $region28: #{lstm_net_forward.3} parent=11 // pred_fallthru
          _
        // Predicated region
        $region29: #{lstm_net_forward.3} parent=11 // pred_check
          %p304 = pneg %p150
        $region30: #{lstm_net_forward.3} parent=11 // pred_check_branch
          %306 = sbr.rel (%p304) target = $region32
        $region31: #{lstm_net_forward.3} parent=11 // pred_region
          _
        $region32: #{lstm_net_forward.3} parent=11 // pred_fallthru
          _
        // Predicated region
        $region33: #{lstm_net_forward.3} parent=11 // pred_check
          %p307 = pneg %p171
        $region34: #{lstm_net_forward.3} parent=11 // pred_check_branch
          %309 = sbr.rel (%p307) target = $region36
        $region35: #{lstm_net_forward.3} parent=11 // pred_region
          _
        $region36: #{lstm_net_forward.3} parent=11 // pred_fallthru
          _
        // Predicated region
        $region37: #{lstm_net_forward.3} parent=11 // pred_check
          %p310 = pneg %p192
        $region38: #{lstm_net_forward.3} parent=11 // pred_check_branch
          %312 = sbr.rel (%p310) target = $region40
        $region39: #{lstm_net_forward.3} parent=11 // pred_region
          _
        $region40: #{lstm_net_forward.3} parent=11 // pred_fallthru
          _
      $region12: #{lstm_net_forward.3} parent=5 // pred_fallthru
        _
      %p313 = scmp.lt.s32.totalorder %s19, 4
      // Predicated region
      $region41: #{lstm_net_forward.3} parent=5 // pred_check
        %p314 = pneg %p313
      $region42: #{lstm_net_forward.3} parent=5 // pred_check_branch
        %316 = sbr.rel (%p314) target = $region44
      $region43: #{lstm_net_forward.3} parent=5 // pred_region
        // Predicated region
        $region45: #{lstm_net_forward.3} parent=43 // pred_check
          %p317 = pneg %p39
        $region46: #{lstm_net_forward.3} parent=43 // pred_check_branch
          %319 = sbr.rel (%p317) target = $region48
        $region47: #{lstm_net_forward.3} parent=43 // pred_region
          %s320 = smul.u32 2, %s19
          %p321 = scmp.lt.s32.totalorder %s320, 7
          %s322 = scalar_select %p321, %s320, 7
          %s323 = smul.addr %s322, 4
          %s324 = scalar_lea.vmem %s0, %s323
          %s325 = smul.u32 2, %s19
        $region48: #{lstm_net_forward.3} parent=43 // pred_fallthru
          _
      $region44: #{lstm_net_forward.3} parent=5 // pred_fallthru
        _
      %p326 = scmp.le.s32.totalorder 1, %s19
      %p327 = scmp.lt.s32.totalorder %s19, 5
      %p328 = pnand %p326, %p327
      %p329 = pneg %p328
      // Predicated region
      $region49: #{lstm_net_forward.3} parent=5 // pred_check
        _
      $region50: #{lstm_net_forward.3} parent=5 // pred_check_branch
        %331 = sbr.rel (%p328) target = $region52
      $region51: #{lstm_net_forward.3} parent=5 // pred_region
        %s332 = ssub.s32 %s19, 1
        // Predicated region
        $region53: #{lstm_net_forward.3} parent=51 // pred_check
          %p333 = pneg %p108
        $region54: #{lstm_net_forward.3} parent=51 // pred_check_branch
          %335 = sbr.rel (%p333) target = $region56
        $region55: #{lstm_net_forward.3} parent=51 // pred_region
          %337 = dma.done [#allocation6], 4096
        $region56: #{lstm_net_forward.3} parent=51 // pred_fallthru
          _
        // Predicated region
        $region57: #{lstm_net_forward.3} parent=51 // pred_check
          %p338 = pneg %p129
        $region58: #{lstm_net_forward.3} parent=51 // pred_check_branch
          %340 = sbr.rel (%p338) target = $region60
        $region59: #{lstm_net_forward.3} parent=51 // pred_region
          %342 = dma.done [#allocation8], 4096
        $region60: #{lstm_net_forward.3} parent=51 // pred_fallthru
          _
        %s343 = smul.u32 2, %s24
        %p344 = scmp.lt.s32.totalorder %s343, 7
        %s345 = scalar_select %p344, %s343, 7
        %s346 = smul.addr %s345, 4
        %s347 = scalar_lea.vmem %s0, %s346
        %p348 = pneg %p45
        %p349 = pneg %p42
        %p350 = pneg %p66
        %p351 = pneg %p63
        %p352 = pneg %p87
        %p353 = pneg %p84
        %p354 = pneg %p108
        %p355 = pneg %p105
        %p356 = pneg %p129
        %p357 = pneg %p126
        %p358 = pneg %p150
        %p359 = pneg %p147
        %p360 = pneg %p171
        %p361 = pneg %p168
        %p362 = pneg %p192
        %p363 = pneg %p189
        %p364 = pneg %p213
        %p365 = pneg %p210
        %p366 = pneg %p234
        %p367 = pneg %p231
        %p368 = pneg %p255
        %p369 = pneg %p252
        %s370 = smul.u32 2, %s24
        %p371 = scmp.lt.s32.totalorder %s370, 7
        %s372 = scalar_select %p371, %s370, 7
        %s373 = smul.addr %s372, 4
        %s374 = scalar_lea.vmem %s0, %s373
        %s375 = smul.u32 2, %s24
        %p376 = scmp.eq.s32.totalorder %s24, 0
        // Predicated region
        $region61: #{lstm_net_forward.3} parent=51 // pred_check
          %p377 = pneg %p376
        $region62: #{lstm_net_forward.3} parent=51 // pred_check_branch
          %379 = sbr.rel (%p377) target = $region64
        $region63: #{lstm_net_forward.3} parent=51 // pred_region
          %v380 = vld [vmem:[%s1] sm:$0xff]
          %381 = vst [vmem:[#allocation3] sm:$0xff] %v380
          %v382 = vld [vmem:[%s2] sm:$0xff]
          %383 = vst [vmem:[#allocation4] sm:$0xff] %v382
        $region64: #{lstm_net_forward.3} parent=51 // pred_fallthru
          _
        %v384 = vld [vmem:[%s374] sm:$0xf]
        %v385 = vld [vmem:[%s374 + $0x4] sm:$0xf]
        %v386 = vld [vmem:[#allocation5] sm:$0xff]
        %v387 = vld [vmem:[#allocation5 + $0x8] sm:$0xff]
        %v388 = vld [vmem:[#allocation5 + $0x10] sm:$0xff]
        %v389 = vld [vmem:[#allocation5 + $0x18] sm:$0xff]
        %v390 = vld [vmem:[#allocation5 + $0x20] sm:$0xff]
        %v391 = vld [vmem:[#allocation5 + $0x28] sm:$0xff]
        %v392 = vld [vmem:[#allocation5 + $0x30] sm:$0xff]
        %v393 = vld [vmem:[#allocation5 + $0x38] sm:$0xff]
        %v394 = vld [vmem:[#allocation5 + $0x40] sm:$0xff]
        %v395 = vld [vmem:[#allocation5 + $0x48] sm:$0xff]
        %v396 = vld [vmem:[#allocation5 + $0x50] sm:$0xff]
        %v397 = vld [vmem:[#allocation5 + $0x58] sm:$0xff]
        %v398 = vld [vmem:[#allocation5 + $0x60] sm:$0xff]
        %v399 = vld [vmem:[#allocation5 + $0x68] sm:$0xff]
        %v400 = vld [vmem:[#allocation5 + $0x70] sm:$0xff]
        %v401 = vld [vmem:[#allocation5 + $0x78] sm:$0xff]
        %v402 = vld [vmem:[#allocation5 + $0x80] sm:$0xff]
        %v403 = vld [vmem:[#allocation5 + $0x88] sm:$0xff]
        %v404 = vld [vmem:[#allocation5 + $0x90] sm:$0xff]
        %v405 = vld [vmem:[#allocation5 + $0x98] sm:$0xff]
        %v406 = vld [vmem:[#allocation5 + $0xa0] sm:$0xff]
        %v407 = vld [vmem:[#allocation5 + $0xa8] sm:$0xff]
        %v408 = vld [vmem:[#allocation5 + $0xb0] sm:$0xff]
        %v409 = vld [vmem:[#allocation5 + $0xb8] sm:$0xff]
        %v410 = vld [vmem:[#allocation5 + $0xc0] sm:$0xff]
        %v411 = vld [vmem:[#allocation5 + $0xc8] sm:$0xff]
        %v412 = vld [vmem:[#allocation5 + $0xd0] sm:$0xff]
        %v413 = vld [vmem:[#allocation5 + $0xd8] sm:$0xff]
        %v414 = vld [vmem:[#allocation5 + $0xe0] sm:$0xff]
        %v415 = vld [vmem:[#allocation5 + $0xe8] sm:$0xff]
        %v416 = vld [vmem:[#allocation5 + $0xf0] sm:$0xff]
        %v417 = vld [vmem:[#allocation5 + $0xf8] sm:$0xff]
        %v418 = vld [vmem:[%s5] sm:$0xf]
        %v420 = vperm.slane %v418, 0
        %v421 = vperm.slane %v418, 1
        %v422 = vperm.slane %v418, 2
        %v423 = vperm.slane %v418, 3
        %v430 = vunpack.c.l.b16 %v384
        %v431 = vunpack.c.l.b16 %v385
        %v432 = vpack.c.b16 %v431, %v430
        %v466 = vunpack.c.l.b16 %v386
        %v467 = vunpack.c.h.b16 %v386
        %v468 = vunpack.c.l.b16 %v387
        %v469 = vunpack.c.h.b16 %v387
        %v470 = vunpack.c.l.b16 %v388
        %v471 = vunpack.c.h.b16 %v388
        %v472 = vunpack.c.l.b16 %v389
        %v473 = vunpack.c.h.b16 %v389
        %v474 = vunpack.c.l.b16 %v390
        %v475 = vunpack.c.h.b16 %v390
        %v476 = vunpack.c.l.b16 %v391
        %v477 = vunpack.c.h.b16 %v391
        %v478 = vunpack.c.l.b16 %v392
        %v479 = vunpack.c.h.b16 %v392
        %v480 = vunpack.c.l.b16 %v393
        %v481 = vunpack.c.h.b16 %v393
        %v482 = vunpack.c.l.b16 %v394
        %v483 = vunpack.c.h.b16 %v394
        %v484 = vunpack.c.l.b16 %v395
        %v485 = vunpack.c.h.b16 %v395
        %v486 = vunpack.c.l.b16 %v396
        %v487 = vunpack.c.h.b16 %v396
        %v488 = vunpack.c.l.b16 %v397
        %v489 = vunpack.c.h.b16 %v397
        %v490 = vunpack.c.l.b16 %v398
        %v491 = vunpack.c.h.b16 %v398
        %v492 = vunpack.c.l.b16 %v399
        %v493 = vunpack.c.h.b16 %v399
        %v494 = vunpack.c.l.b16 %v400
        %v495 = vunpack.c.h.b16 %v400
        %v496 = vunpack.c.l.b16 %v401
        %v497 = vunpack.c.h.b16 %v401
        %v498 = vunpack.c.l.b16 %v402
        %v499 = vunpack.c.h.b16 %v402
        %v500 = vunpack.c.l.b16 %v403
        %v501 = vunpack.c.h.b16 %v403
        %v502 = vunpack.c.l.b16 %v404
        %v503 = vunpack.c.h.b16 %v404
        %v504 = vunpack.c.l.b16 %v405
        %v505 = vunpack.c.h.b16 %v405
        %v506 = vunpack.c.l.b16 %v406
        %v507 = vunpack.c.h.b16 %v406
        %v508 = vunpack.c.l.b16 %v407
        %v509 = vunpack.c.h.b16 %v407
        %v510 = vunpack.c.l.b16 %v408
        %v511 = vunpack.c.h.b16 %v408
        %v512 = vunpack.c.l.b16 %v409
        %v513 = vunpack.c.h.b16 %v409
        %v514 = vunpack.c.l.b16 %v410
        %v515 = vunpack.c.h.b16 %v410
        %v516 = vunpack.c.l.b16 %v411
        %v517 = vunpack.c.h.b16 %v411
        %v518 = vunpack.c.l.b16 %v412
        %v519 = vunpack.c.h.b16 %v412
        %v520 = vunpack.c.l.b16 %v413
        %v521 = vunpack.c.h.b16 %v413
        %v522 = vunpack.c.l.b16 %v414
        %v523 = vunpack.c.h.b16 %v414
        %v524 = vunpack.c.l.b16 %v415
        %v525 = vunpack.c.h.b16 %v415
        %v526 = vunpack.c.l.b16 %v416
        %v527 = vunpack.c.h.b16 %v416
        %v528 = vunpack.c.l.b16 %v417
        %v529 = vunpack.c.h.b16 %v417
        %v530 = vpack.c.b16 %v470, %v466
        %v531 = vpack.c.b16 %v471, %v467
        %v532 = vpack.c.b16 %v472, %v468
        %v533 = vpack.c.b16 %v473, %v469
        %v534 = vpack.c.b16 %v478, %v474
        %v535 = vpack.c.b16 %v479, %v475
        %v536 = vpack.c.b16 %v480, %v476
        %v537 = vpack.c.b16 %v481, %v477
        %v538 = vpack.c.b16 %v486, %v482
        %v539 = vpack.c.b16 %v487, %v483
        %v540 = vpack.c.b16 %v488, %v484
        %v541 = vpack.c.b16 %v489, %v485
        %v542 = vpack.c.b16 %v494, %v490
        %v543 = vpack.c.b16 %v495, %v491
        %v544 = vpack.c.b16 %v496, %v492
        %v545 = vpack.c.b16 %v497, %v493
        %v546 = vpack.c.b16 %v502, %v498
        %v547 = vpack.c.b16 %v503, %v499
        %v548 = vpack.c.b16 %v504, %v500
        %v549 = vpack.c.b16 %v505, %v501
        %v550 = vpack.c.b16 %v510, %v506
        %v551 = vpack.c.b16 %v511, %v507
        %v552 = vpack.c.b16 %v512, %v508
        %v553 = vpack.c.b16 %v513, %v509
        %v554 = vpack.c.b16 %v518, %v514
        %v555 = vpack.c.b16 %v519, %v515
        %v556 = vpack.c.b16 %v520, %v516
        %v557 = vpack.c.b16 %v521, %v517
        %v558 = vpack.c.b16 %v526, %v522
        %v559 = vpack.c.b16 %v527, %v523
        %v560 = vpack.c.b16 %v528, %v524
        %v561 = vpack.c.b16 %v529, %v525
        %594 = vmatpush.bf16.msra.mxu0 %v558
        %595 = vmatpush.bf16.msra.mxu0 %v554
        %596 = vmatpush.bf16.msra.mxu0 %v550
        %597 = vmatpush.bf16.msra.mxu0 %v546
        %598 = vmatpush.bf16.msra.mxu0 %v542
        %599 = vmatpush.bf16.msra.mxu0 %v538
        %600 = vmatpush.bf16.msra.mxu0 %v534
        %601 = vmatpush.bf16.msra.mxu0 %v530
        %602 = vmatmul.bf16.gmra.mxu0 %v432
        %v603 = vpop.f32.mrf.mxu0
        %v604 = vadd.f32 %v420, %v603
        %v605 = vpop.f32.mrf.mxu0
        %v606 = vadd.f32 %v420, %v605
        %607 = vdwg.mxu0
        %608 = vmatpush.bf16.msra.mxu0 %v559
        %609 = vmatpush.bf16.msra.mxu0 %v555
        %610 = vmatpush.bf16.msra.mxu0 %v551
        %611 = vmatpush.bf16.msra.mxu0 %v547
        %612 = vmatpush.bf16.msra.mxu0 %v543
        %613 = vmatpush.bf16.msra.mxu0 %v539
        %614 = vmatpush.bf16.msra.mxu0 %v535
        %615 = vmatpush.bf16.msra.mxu0 %v531
        %616 = vmatmul.bf16.gmra.mxu0 %v432
        %v617 = vpop.f32.mrf.mxu0
        %v618 = vadd.f32 %v421, %v617
        %v619 = vpop.f32.mrf.mxu0
        %v620 = vadd.f32 %v421, %v619
        %621 = vdwg.mxu0
        %622 = vmatpush.bf16.msra.mxu0 %v560
        %623 = vmatpush.bf16.msra.mxu0 %v556
        %624 = vmatpush.bf16.msra.mxu0 %v552
        %625 = vmatpush.bf16.msra.mxu0 %v548
        %626 = vmatpush.bf16.msra.mxu0 %v544
        %627 = vmatpush.bf16.msra.mxu0 %v540
        %628 = vmatpush.bf16.msra.mxu0 %v536
        %629 = vmatpush.bf16.msra.mxu0 %v532
        %630 = vmatmul.bf16.gmra.mxu0 %v432
        %v631 = vpop.f32.mrf.mxu0
        %v632 = vadd.f32 %v422, %v631
        %v633 = vpop.f32.mrf.mxu0
        %v634 = vadd.f32 %v422, %v633
        %635 = vdwg.mxu0
        %636 = vmatpush.bf16.msra.mxu0 %v561
        %637 = vmatpush.bf16.msra.mxu0 %v557
        %638 = vmatpush.bf16.msra.mxu0 %v553
        %639 = vmatpush.bf16.msra.mxu0 %v549
        %640 = vmatpush.bf16.msra.mxu0 %v545
        %641 = vmatpush.bf16.msra.mxu0 %v541
        %642 = vmatpush.bf16.msra.mxu0 %v537
        %643 = vmatpush.bf16.msra.mxu0 %v533
        %644 = vmatmul.bf16.gmra.mxu0 %v432
        %v645 = vpop.f32.mrf.mxu0
        %v646 = vadd.f32 %v423, %v645
        %v647 = vpop.f32.mrf.mxu0
        %v648 = vadd.f32 %v423, %v647
        %649 = vdwg.mxu0
        %650 = vst [vmem:[#allocation2] sm:$0xff] %v604
        %651 = vst [vmem:[#allocation2 + $0x8] sm:$0xff] %v618
        %652 = vst [vmem:[#allocation2 + $0x10] sm:$0xff] %v632
        %653 = vst [vmem:[#allocation2 + $0x18] sm:$0xff] %v646
        %654 = vst [vmem:[#allocation2 + $0x20] sm:$0xff] %v606
        %655 = vst [vmem:[#allocation2 + $0x28] sm:$0xff] %v620
        %656 = vst [vmem:[#allocation2 + $0x30] sm:$0xff] %v634
        %657 = vst [vmem:[#allocation2 + $0x38] sm:$0xff] %v648
        %v658 = vld [vmem:[#allocation3] sm:$0xff]
        %v659 = vld [vmem:[#allocation4] sm:$0xff]
        %s660 = smul.u32 0, 4
        %s661 = smul.addr %s660, 8
        %s662 = scalar_lea.vmem [#allocation2], %s661
        %v663 = vld [vmem:[%s662] sm:$0xff]
        %v664 = vld [vmem:[%s662 + $0x8] sm:$0xff]
        %v665 = vld [vmem:[%s662 + $0x10] sm:$0xff]
        %v666 = vld [vmem:[%s662 + $0x18] sm:$0xff]
        %v667 = vpack.c.bf16 %v658, %v658
        %v668 = vld [vmem:[#allocation7] sm:$0xff]
        %v669 = vld [vmem:[#allocation7 + $0x8] sm:$0xff]
        %v670 = vld [vmem:[#allocation7 + $0x10] sm:$0xff]
        %v671 = vld [vmem:[#allocation7 + $0x18] sm:$0xff]
        %v672 = vld [vmem:[#allocation7 + $0x20] sm:$0xff]
        %v673 = vld [vmem:[#allocation7 + $0x28] sm:$0xff]
        %v674 = vld [vmem:[#allocation7 + $0x30] sm:$0xff]
        %v675 = vld [vmem:[#allocation7 + $0x38] sm:$0xff]
        %v676 = vld [vmem:[#allocation7 + $0x40] sm:$0xff]
        %v677 = vld [vmem:[#allocation7 + $0x48] sm:$0xff]
        %v678 = vld [vmem:[#allocation7 + $0x50] sm:$0xff]
        %v679 = vld [vmem:[#allocation7 + $0x58] sm:$0xff]
        %v680 = vld [vmem:[#allocation7 + $0x60] sm:$0xff]
        %v681 = vld [vmem:[#allocation7 + $0x68] sm:$0xff]
        %v682 = vld [vmem:[#allocation7 + $0x70] sm:$0xff]
        %v683 = vld [vmem:[#allocation7 + $0x78] sm:$0xff]
        %v684 = vld [vmem:[#allocation7 + $0x80] sm:$0xff]
        %v685 = vld [vmem:[#allocation7 + $0x88] sm:$0xff]
        %v686 = vld [vmem:[#allocation7 + $0x90] sm:$0xff]
        %v687 = vld [vmem:[#allocation7 + $0x98] sm:$0xff]
        %v688 = vld [vmem:[#allocation7 + $0xa0] sm:$0xff]
        %v689 = vld [vmem:[#allocation7 + $0xa8] sm:$0xff]
        %v690 = vld [vmem:[#allocation7 + $0xb0] sm:$0xff]
        %v691 = vld [vmem:[#allocation7 + $0xb8] sm:$0xff]
        %v692 = vld [vmem:[#allocation7 + $0xc0] sm:$0xff]
        %v693 = vld [vmem:[#allocation7 + $0xc8] sm:$0xff]
        %v694 = vld [vmem:[#allocation7 + $0xd0] sm:$0xff]
        %v695 = vld [vmem:[#allocation7 + $0xd8] sm:$0xff]
        %v696 = vld [vmem:[#allocation7 + $0xe0] sm:$0xff]
        %v697 = vld [vmem:[#allocation7 + $0xe8] sm:$0xff]
        %v698 = vld [vmem:[#allocation7 + $0xf0] sm:$0xff]
        %v699 = vld [vmem:[#allocation7 + $0xf8] sm:$0xff]
        %v732 = vunpack.c.l.b16 %v668
        %v733 = vunpack.c.h.b16 %v668
        %v734 = vunpack.c.l.b16 %v669
        %v735 = vunpack.c.h.b16 %v669
        %v736 = vunpack.c.l.b16 %v670
        %v737 = vunpack.c.h.b16 %v670
        %v738 = vunpack.c.l.b16 %v671
        %v739 = vunpack.c.h.b16 %v671
        %v740 = vunpack.c.l.b16 %v672
        %v741 = vunpack.c.h.b16 %v672
        %v742 = vunpack.c.l.b16 %v673
        %v743 = vunpack.c.h.b16 %v673
        %v744 = vunpack.c.l.b16 %v674
        %v745 = vunpack.c.h.b16 %v674
        %v746 = vunpack.c.l.b16 %v675
        %v747 = vunpack.c.h.b16 %v675
        %v748 = vunpack.c.l.b16 %v676
        %v749 = vunpack.c.h.b16 %v676
        %v750 = vunpack.c.l.b16 %v677
        %v751 = vunpack.c.h.b16 %v677
        %v752 = vunpack.c.l.b16 %v678
        %v753 = vunpack.c.h.b16 %v678
        %v754 = vunpack.c.l.b16 %v679
        %v755 = vunpack.c.h.b16 %v679
        %v756 = vunpack.c.l.b16 %v680
        %v757 = vunpack.c.h.b16 %v680
        %v758 = vunpack.c.l.b16 %v681
        %v759 = vunpack.c.h.b16 %v681
        %v760 = vunpack.c.l.b16 %v682
        %v761 = vunpack.c.h.b16 %v682
        %v762 = vunpack.c.l.b16 %v683
        %v763 = vunpack.c.h.b16 %v683
        %v764 = vunpack.c.l.b16 %v684
        %v765 = vunpack.c.h.b16 %v684
        %v766 = vunpack.c.l.b16 %v685
        %v767 = vunpack.c.h.b16 %v685
        %v768 = vunpack.c.l.b16 %v686
        %v769 = vunpack.c.h.b16 %v686
        %v770 = vunpack.c.l.b16 %v687
        %v771 = vunpack.c.h.b16 %v687
        %v772 = vunpack.c.l.b16 %v688
        %v773 = vunpack.c.h.b16 %v688
        %v774 = vunpack.c.l.b16 %v689
        %v775 = vunpack.c.h.b16 %v689
        %v776 = vunpack.c.l.b16 %v690
        %v777 = vunpack.c.h.b16 %v690
        %v778 = vunpack.c.l.b16 %v691
        %v779 = vunpack.c.h.b16 %v691
        %v780 = vunpack.c.l.b16 %v692
        %v781 = vunpack.c.h.b16 %v692
        %v782 = vunpack.c.l.b16 %v693
        %v783 = vunpack.c.h.b16 %v693
        %v784 = vunpack.c.l.b16 %v694
        %v785 = vunpack.c.h.b16 %v694
        %v786 = vunpack.c.l.b16 %v695
        %v787 = vunpack.c.h.b16 %v695
        %v788 = vunpack.c.l.b16 %v696
        %v789 = vunpack.c.h.b16 %v696
        %v790 = vunpack.c.l.b16 %v697
        %v791 = vunpack.c.h.b16 %v697
        %v792 = vunpack.c.l.b16 %v698
        %v793 = vunpack.c.h.b16 %v698
        %v794 = vunpack.c.l.b16 %v699
        %v795 = vunpack.c.h.b16 %v699
        %v796 = vpack.c.b16 %v736, %v732
        %v797 = vpack.c.b16 %v737, %v733
        %v798 = vpack.c.b16 %v738, %v734
        %v799 = vpack.c.b16 %v739, %v735
        %v800 = vpack.c.b16 %v744, %v740
        %v801 = vpack.c.b16 %v745, %v741
        %v802 = vpack.c.b16 %v746, %v742
        %v803 = vpack.c.b16 %v747, %v743
        %v804 = vpack.c.b16 %v752, %v748
        %v805 = vpack.c.b16 %v753, %v749
        %v806 = vpack.c.b16 %v754, %v750
        %v807 = vpack.c.b16 %v755, %v751
        %v808 = vpack.c.b16 %v760, %v756
        %v809 = vpack.c.b16 %v761, %v757
        %v810 = vpack.c.b16 %v762, %v758
        %v811 = vpack.c.b16 %v763, %v759
        %v812 = vpack.c.b16 %v768, %v764
        %v813 = vpack.c.b16 %v769, %v765
        %v814 = vpack.c.b16 %v770, %v766
        %v815 = vpack.c.b16 %v771, %v767
        %v816 = vpack.c.b16 %v776, %v772
        %v817 = vpack.c.b16 %v777, %v773
        %v818 = vpack.c.b16 %v778, %v774
        %v819 = vpack.c.b16 %v779, %v775
        %v820 = vpack.c.b16 %v784, %v780
        %v821 = vpack.c.b16 %v785, %v781
        %v822 = vpack.c.b16 %v786, %v782
        %v823 = vpack.c.b16 %v787, %v783
        %v824 = vpack.c.b16 %v792, %v788
        %v825 = vpack.c.b16 %v793, %v789
        %v826 = vpack.c.b16 %v794, %v790
        %v827 = vpack.c.b16 %v795, %v791
        %860 = vmatpush.bf16.msra.mxu0 %v824
        %861 = vmatpush.bf16.msra.mxu0 %v820
        %862 = vmatpush.bf16.msra.mxu0 %v816
        %863 = vmatpush.bf16.msra.mxu0 %v812
        %864 = vmatpush.bf16.msra.mxu0 %v808
        %865 = vmatpush.bf16.msra.mxu0 %v804
        %866 = vmatpush.bf16.msra.mxu0 %v800
        %867 = vmatpush.bf16.msra.mxu0 %v796
        %868 = vmatmul.bf16.gmra.mxu0 %v667
        %v869 = vpop.f32.mrf.mxu0
        %v870 = vadd.f32 0.0, %v869
        %v871 = vpop.f32.mrf.mxu0
        %872 = vdwg.mxu0
        %873 = vmatpush.bf16.msra.mxu0 %v825
        %874 = vmatpush.bf16.msra.mxu0 %v821
        %875 = vmatpush.bf16.msra.mxu0 %v817
        %876 = vmatpush.bf16.msra.mxu0 %v813
        %877 = vmatpush.bf16.msra.mxu0 %v809
        %878 = vmatpush.bf16.msra.mxu0 %v805
        %879 = vmatpush.bf16.msra.mxu0 %v801
        %880 = vmatpush.bf16.msra.mxu0 %v797
        %881 = vmatmul.bf16.gmra.mxu0 %v667
        %v882 = vpop.f32.mrf.mxu0
        %v883 = vadd.f32 0.0, %v882
        %v884 = vpop.f32.mrf.mxu0
        %885 = vdwg.mxu0
        %886 = vmatpush.bf16.msra.mxu0 %v826
        %887 = vmatpush.bf16.msra.mxu0 %v822
        %888 = vmatpush.bf16.msra.mxu0 %v818
        %889 = vmatpush.bf16.msra.mxu0 %v814
        %890 = vmatpush.bf16.msra.mxu0 %v810
        %891 = vmatpush.bf16.msra.mxu0 %v806
        %892 = vmatpush.bf16.msra.mxu0 %v802
        %893 = vmatpush.bf16.msra.mxu0 %v798
        %894 = vmatmul.bf16.gmra.mxu0 %v667
        %v895 = vpop.f32.mrf.mxu0
        %v896 = vadd.f32 0.0, %v895
        %v897 = vpop.f32.mrf.mxu0
        %898 = vdwg.mxu0
        %899 = vmatpush.bf16.msra.mxu0 %v827
        %900 = vmatpush.bf16.msra.mxu0 %v823
        %901 = vmatpush.bf16.msra.mxu0 %v819
        %902 = vmatpush.bf16.msra.mxu0 %v815
        %903 = vmatpush.bf16.msra.mxu0 %v811
        %904 = vmatpush.bf16.msra.mxu0 %v807
        %905 = vmatpush.bf16.msra.mxu0 %v803
        %906 = vmatpush.bf16.msra.mxu0 %v799
        %907 = vmatmul.bf16.gmra.mxu0 %v667
        %v908 = vpop.f32.mrf.mxu0
        %v909 = vadd.f32 0.0, %v908
        %v910 = vpop.f32.mrf.mxu0
        %911 = vdwg.mxu0
        %v912 = vadd.f32 %v663, %v870
        %v913 = vadd.f32 %v664, %v883
        %v914 = vadd.f32 %v665, %v896
        %v915 = vadd.f32 %v666, %v909
        %v916 = vmul.f32 %v912, 0.5
        %v917 = vtanh.pop %v916
        %v918 = vmul.f32 %v917, 0.5
        %v919 = vadd.f32 %v918, 0.5
        %v920 = vmul.f32 %v913, 0.5
        %v921 = vtanh.pop %v920
        %v922 = vmul.f32 %v921, 0.5
        %v923 = vadd.f32 %v922, 0.5
        %v924 = vtanh.pop %v914
        %v925 = vmul.f32 %v915, 0.5
        %v926 = vtanh.pop %v925
        %v927 = vmul.f32 %v926, 0.5
        %v928 = vadd.f32 %v927, 0.5
        %v929 = vmul.f32 %v923, %v659
        %v930 = vmul.f32 %v919, %v924
        %v931 = vadd.f32 %v929, %v930
        %v932 = vtanh.pop %v931
        %v933 = vmul.f32 %v928, %v932
        %s934 = smul.u32 1, 4
        %s935 = smul.addr %s934, 8
        %s936 = scalar_lea.vmem [#allocation2], %s935
        %v937 = vld [vmem:[%s936] sm:$0xff]
        %v938 = vld [vmem:[%s936 + $0x8] sm:$0xff]
        %v939 = vld [vmem:[%s936 + $0x10] sm:$0xff]
        %v940 = vld [vmem:[%s936 + $0x18] sm:$0xff]
        %v941 = vpack.c.bf16 %v933, %v933
        %942 = vmatpush.bf16.msra.mxu0 %v824
        %943 = vmatpush.bf16.msra.mxu0 %v820
        %944 = vmatpush.bf16.msra.mxu0 %v816
        %945 = vmatpush.bf16.msra.mxu0 %v812
        %946 = vmatpush.bf16.msra.mxu0 %v808
        %947 = vmatpush.bf16.msra.mxu0 %v804
        %948 = vmatpush.bf16.msra.mxu0 %v800
        %949 = vmatpush.bf16.msra.mxu0 %v796
        %950 = vmatmul.bf16.gmra.mxu0 %v941
        %v951 = vpop.f32.mrf.mxu0
        %v952 = vadd.f32 0.0, %v951
        %v953 = vpop.f32.mrf.mxu0
        %954 = vdwg.mxu0
        %955 = vmatpush.bf16.msra.mxu0 %v825
        %956 = vmatpush.bf16.msra.mxu0 %v821
        %957 = vmatpush.bf16.msra.mxu0 %v817
        %958 = vmatpush.bf16.msra.mxu0 %v813
        %959 = vmatpush.bf16.msra.mxu0 %v809
        %960 = vmatpush.bf16.msra.mxu0 %v805
        %961 = vmatpush.bf16.msra.mxu0 %v801
        %962 = vmatpush.bf16.msra.mxu0 %v797
        %963 = vmatmul.bf16.gmra.mxu0 %v941
        %v964 = vpop.f32.mrf.mxu0
        %v965 = vadd.f32 0.0, %v964
        %v966 = vpop.f32.mrf.mxu0
        %967 = vdwg.mxu0
        %968 = vmatpush.bf16.msra.mxu0 %v826
        %969 = vmatpush.bf16.msra.mxu0 %v822
        %970 = vmatpush.bf16.msra.mxu0 %v818
        %971 = vmatpush.bf16.msra.mxu0 %v814
        %972 = vmatpush.bf16.msra.mxu0 %v810
        %973 = vmatpush.bf16.msra.mxu0 %v806
        %974 = vmatpush.bf16.msra.mxu0 %v802
        %975 = vmatpush.bf16.msra.mxu0 %v798
        %976 = vmatmul.bf16.gmra.mxu0 %v941
        %v977 = vpop.f32.mrf.mxu0
        %v978 = vadd.f32 0.0, %v977
        %v979 = vpop.f32.mrf.mxu0
        %980 = vdwg.mxu0
        %981 = vmatpush.bf16.msra.mxu0 %v827
        %982 = vmatpush.bf16.msra.mxu0 %v823
        %983 = vmatpush.bf16.msra.mxu0 %v819
        %984 = vmatpush.bf16.msra.mxu0 %v815
        %985 = vmatpush.bf16.msra.mxu0 %v811
        %986 = vmatpush.bf16.msra.mxu0 %v807
        %987 = vmatpush.bf16.msra.mxu0 %v803
        %988 = vmatpush.bf16.msra.mxu0 %v799
        %989 = vmatmul.bf16.gmra.mxu0 %v941
        %v990 = vpop.f32.mrf.mxu0
        %v991 = vadd.f32 0.0, %v990
        %v992 = vpop.f32.mrf.mxu0
        %993 = vdwg.mxu0
        %v994 = vadd.f32 %v937, %v952
        %v995 = vadd.f32 %v938, %v965
        %v996 = vadd.f32 %v939, %v978
        %v997 = vadd.f32 %v940, %v991
        %v998 = vmul.f32 %v994, 0.5
        %v999 = vtanh.pop %v998
        %v1000 = vmul.f32 %v999, 0.5
        %v1001 = vadd.f32 %v1000, 0.5
        %v1002 = vmul.f32 %v995, 0.5
        %v1003 = vtanh.pop %v1002
        %v1004 = vmul.f32 %v1003, 0.5
        %v1005 = vadd.f32 %v1004, 0.5
        %v1006 = vtanh.pop %v996
        %v1007 = vmul.f32 %v997, 0.5
        %v1008 = vtanh.pop %v1007
        %v1009 = vmul.f32 %v1008, 0.5
        %v1010 = vadd.f32 %v1009, 0.5
        %v1011 = vmul.f32 %v1005, %v931
        %v1012 = vmul.f32 %v1001, %v1006
        %v1013 = vadd.f32 %v1011, %v1012
        %v1014 = vtanh.pop %v1013
        %v1015 = vmul.f32 %v1010, %v1014
        %1016 = vst [vmem:[#allocation3] sm:$0xff] %v1015
        %1017 = vst [vmem:[#allocation4] sm:$0xff] %v1013
        %p1018 = scmp.eq.s32.totalorder %s24, 3
        // Predicated region
        $region65: #{lstm_net_forward.3} parent=51 // pred_check
          %p1019 = pneg %p1018
        $region66: #{lstm_net_forward.3} parent=51 // pred_check_branch
          %1021 = sbr.rel (%p1019) target = $region68
        $region67: #{lstm_net_forward.3} parent=51 // pred_region
          %1022 = vst [vmem:[%s9] sm:$0xff] %v1015
          %1023 = vst [vmem:[%s10] sm:$0xff] %v1013
          %v1024 = vmax.f32 %v1015, 0.0
          %v1025 = vpack.c.bf16 %v1024, %v1024
          %v1026 = vld [vmem:[%s6] sm:$0xf]
          %v1027 = vld [vmem:[%s6 + $0x4] sm:$0xf]
          %v1028 = vld [vmem:[%s6 + $0x8] sm:$0xf]
          %v1029 = vld [vmem:[%s6 + $0xc] sm:$0xf]
          %v1030 = vld [vmem:[%s6 + $0x10] sm:$0xf]
          %v1031 = vld [vmem:[%s6 + $0x14] sm:$0xf]
          %v1032 = vld [vmem:[%s6 + $0x18] sm:$0xf]
          %v1033 = vld [vmem:[%s6 + $0x1c] sm:$0xf]
          %v1034 = vld [vmem:[%s6 + $0x20] sm:$0xf]
          %v1035 = vld [vmem:[%s6 + $0x24] sm:$0xf]
          %v1036 = vld [vmem:[%s6 + $0x28] sm:$0xf]
          %v1037 = vld [vmem:[%s6 + $0x2c] sm:$0xf]
          %v1038 = vld [vmem:[%s6 + $0x30] sm:$0xf]
          %v1039 = vld [vmem:[%s6 + $0x34] sm:$0xf]
          %v1040 = vld [vmem:[%s6 + $0x38] sm:$0xf]
          %v1041 = vld [vmem:[%s6 + $0x3c] sm:$0xf]
          %v1042 = vld [vmem:[%s7] sm:$0x1]
          %v1044 = vperm.slane %v1042, 0
          %v1062 = vunpack.c.l.b16 %v1026
          %v1063 = vunpack.c.l.b16 %v1027
          %v1064 = vunpack.c.l.b16 %v1028
          %v1065 = vunpack.c.l.b16 %v1029
          %v1066 = vunpack.c.l.b16 %v1030
          %v1067 = vunpack.c.l.b16 %v1031
          %v1068 = vunpack.c.l.b16 %v1032
          %v1069 = vunpack.c.l.b16 %v1033
          %v1070 = vunpack.c.l.b16 %v1034
          %v1071 = vunpack.c.l.b16 %v1035
          %v1072 = vunpack.c.l.b16 %v1036
          %v1073 = vunpack.c.l.b16 %v1037
          %v1074 = vunpack.c.l.b16 %v1038
          %v1075 = vunpack.c.l.b16 %v1039
          %v1076 = vunpack.c.l.b16 %v1040
          %v1077 = vunpack.c.l.b16 %v1041
          %v1078 = vpack.c.b16 %v1063, %v1062
          %v1079 = vpack.c.b16 %v1065, %v1064
          %v1080 = vpack.c.b16 %v1067, %v1066
          %v1081 = vpack.c.b16 %v1069, %v1068
          %v1082 = vpack.c.b16 %v1071, %v1070
          %v1083 = vpack.c.b16 %v1073, %v1072
          %v1084 = vpack.c.b16 %v1075, %v1074
          %v1085 = vpack.c.b16 %v1077, %v1076
          %1094 = vmatpush.bf16.msra.mxu0 %v1085
          %1095 = vmatpush.bf16.msra.mxu0 %v1084
          %1096 = vmatpush.bf16.msra.mxu0 %v1083
          %1097 = vmatpush.bf16.msra.mxu0 %v1082
          %1098 = vmatpush.bf16.msra.mxu0 %v1081
          %1099 = vmatpush.bf16.msra.mxu0 %v1080
          %1100 = vmatpush.bf16.msra.mxu0 %v1079
          %1101 = vmatpush.bf16.msra.mxu0 %v1078
          %1102 = vmatmul.bf16.gmra.mxu0 %v1025
          %v1103 = vpop.f32.mrf.mxu0
          %v1104 = vadd.f32 %v1044, %v1103
          %v1105 = vpop.f32.mrf.mxu0
          %1106 = vdwg.mxu0
          %vm1107 = vcmask 31744
          %1108 = vst.msk [vmem:[%s8] sm:$0xff] %vm1107, %v1104
        $region68: #{lstm_net_forward.3} parent=51 // pred_fallthru
          _
        // Predicated region
        $region69: #{lstm_net_forward.3} parent=51 // pred_check
          %p1109 = pneg %p210
        $region70: #{lstm_net_forward.3} parent=51 // pred_check_branch
          %1111 = sbr.rel (%p1109) target = $region72
        $region71: #{lstm_net_forward.3} parent=51 // pred_region
          _
        $region72: #{lstm_net_forward.3} parent=51 // pred_fallthru
          _
        // Predicated region
        $region73: #{lstm_net_forward.3} parent=51 // pred_check
          %p1112 = pneg %p231
        $region74: #{lstm_net_forward.3} parent=51 // pred_check_branch
          %1114 = sbr.rel (%p1112) target = $region76
        $region75: #{lstm_net_forward.3} parent=51 // pred_region
          _
        $region76: #{lstm_net_forward.3} parent=51 // pred_fallthru
          _
        // Predicated region
        $region77: #{lstm_net_forward.3} parent=51 // pred_check
          %p1115 = pneg %p252
        $region78: #{lstm_net_forward.3} parent=51 // pred_check_branch
          %1117 = sbr.rel (%p1115) target = $region80
        $region79: #{lstm_net_forward.3} parent=51 // pred_region
          _
        $region80: #{lstm_net_forward.3} parent=51 // pred_fallthru
          _
        // Predicated region
        $region81: #{lstm_net_forward.3} parent=51 // pred_check
          %p1118 = pneg %p210
        $region82: #{lstm_net_forward.3} parent=51 // pred_check_branch
          %1120 = sbr.rel (%p1118) target = $region84
        $region83: #{lstm_net_forward.3} parent=51 // pred_region
          _
        $region84: #{lstm_net_forward.3} parent=51 // pred_fallthru
          _
        // Predicated region
        $region85: #{lstm_net_forward.3} parent=51 // pred_check
          %p1121 = pneg %p231
        $region86: #{lstm_net_forward.3} parent=51 // pred_check_branch
          %1123 = sbr.rel (%p1121) target = $region88
        $region87: #{lstm_net_forward.3} parent=51 // pred_region
          _
        $region88: #{lstm_net_forward.3} parent=51 // pred_fallthru
          _
        // Predicated region
        $region89: #{lstm_net_forward.3} parent=51 // pred_check
          %p1124 = pneg %p252
        $region90: #{lstm_net_forward.3} parent=51 // pred_check_branch
          %1126 = sbr.rel (%p1124) target = $region92
        $region91: #{lstm_net_forward.3} parent=51 // pred_region
          _
        $region92: #{lstm_net_forward.3} parent=51 // pred_fallthru
          _
      $region52: #{lstm_net_forward.3} parent=5 // pred_fallthru
        _
      %p1127 = scmp.le.s32.totalorder 2, %s19
      // Predicated region
      $region93: #{lstm_net_forward.3} parent=5 // pred_check
        %p1128 = pneg %p1127
      $region94: #{lstm_net_forward.3} parent=5 // pred_check_branch
        %1130 = sbr.rel (%p1128) target = $region96
      $region95: #{lstm_net_forward.3} parent=5 // pred_region
        %s1131 = ssub.s32 %s19, 2
      $region96: #{lstm_net_forward.3} parent=5 // pred_fallthru
        _
    $region6: #{lstm_net_forward.3} parent=1 // loop_footer
      %s23 = sadd.s32 1, %s19
    $region7: #{lstm_net_forward.3} parent=1 // loop_footer_branch
      %18 = sbr.rel target = $region3
    $region8: #{lstm_net_forward.3} parent=1 // loop_exit
      _
    %1132 = vsyncpa [#allocation6], 1
    %s1133 = scalar_lea.sflag [#allocation6], 1
    %1134 = vsyncpa %s1133, 1
    %1135 = vsyncpa [#allocation8], 1

</llo_original>
